<compile_context>
chip_gen: v5e
topology: v5e:2x2
jax: 0.10.0
libtpu: 0.0.40
codegen_flags: <defaults>
</compile_context>

<pallas_src>
import functools

import jax
import jax.numpy as jnp
from jax import lax
from jax.experimental import pallas as pl
from jax.experimental.pallas import tpu as pltpu


def _round_up(n, m):
    return (n + m - 1) // m * m


def _ksae_kernel(x_ref, we_ref, be_ref, wd_ref, bd_ref,
                 dec_ref, sparse_ref, *, k, h_valid):
    # x_ref:      (TB, D_pad)   bf16 flattened input tile
    # we_ref:     (D_pad, H_pad) bf16 encoder weight (transposed vs torch (H, D))
    # be_ref:     (1, H_pad)    f32  encoder bias
    # wd_ref:     (H_pad, D_pad) bf16 decoder weight (transposed vs torch (D, H))
    # bd_ref:     (1, D_pad)    f32  decoder bias
    # dec_ref:    (TB, D_pad)   f32  decoded output tile
    # sparse_ref: (TB, H_pad)   f32  sparse code output tile

    # ---- encoder: Linear(input_dim -> hidden_dim), f32 accumulation --------
    enc = jnp.dot(x_ref[...], we_ref[...],
                  preferred_element_type=jnp.float32)
    enc = enc + be_ref[...]                                    # (TB, H_pad) f32

    tb, h_pad = enc.shape
    col_idx = lax.broadcasted_iota(jnp.int32, (tb, h_pad), 1)
    neg_inf = jnp.float32(-jnp.inf)

    # Padded hidden columns must never win the top-k selection.
    if h_valid < h_pad:
        enc = jnp.where(col_idx < h_valid, enc, neg_inf)

    # ---- k-sparse: keep the k largest activations per row ------------------
    # O(k*H): per iteration find the row max, pick its first occurrence
    # (lowest index wins ties, matching torch.topk order) and knock it out.
    def body(_, work):
        row_max = jnp.max(work, axis=-1, keepdims=True)         # XLU reduce
        is_max = work == row_max
        first = jnp.min(jnp.where(is_max, col_idx, h_pad),
                        axis=-1, keepdims=True)                 # XLU reduce
        pick = col_idx == first
        return jnp.where(pick, neg_inf, work)

    work = lax.fori_loop(0, k, body, enc)

    keep = work == neg_inf                  # exactly the k knocked-out entries
    if h_valid < h_pad:
        keep = jnp.logical_and(keep, col_idx < h_valid)
    sparse = jnp.where(keep, enc, jnp.float32(0.0))             # (TB, H_pad)

    # ---- decoder: Linear(hidden_dim -> input_dim) + Sigmoid ----------------
    dec = jnp.dot(sparse.astype(jnp.bfloat16), wd_ref[...],
                  preferred_element_type=jnp.float32)
    dec = jax.nn.sigmoid(dec + bd_ref[...])                     # (TB, D_pad)

    dec_ref[...] = dec.astype(dec_ref.dtype)
    sparse_ref[...] = sparse.astype(sparse_ref.dtype)


def ksparse_autoencoder_forward(x, w_enc, b_enc, w_dec, b_dec, k, *, tb=128):
    """x: (B, C, H, W) or (B, D). Returns (decoded, sparse_encoded) in f32."""
    B = x.shape[0]
    x2 = x.reshape(B, -1)                                       # flatten (glue)
    D = x2.shape[1]
    H = w_enc.shape[1]
    assert w_enc.shape == (D, H) and w_dec.shape == (H, D)
    assert 0 < k <= H

    # Lane-dense / sublane-aligned padded shapes.
    D_pad = _round_up(D, 128)
    H_pad = _round_up(H, 128)
    TB = _round_up(min(tb, B), 8)
    B_pad = _round_up(B, TB)

    # Pad and cast matmul operands to bf16 (f32 accumulation in-kernel).
    xp = jnp.zeros((B_pad, D_pad), jnp.bfloat16).at[:B, :D].set(
        x2.astype(jnp.bfloat16))
    wep = jnp.zeros((D_pad, H_pad), jnp.bfloat16).at[:D, :H].set(
        w_enc.astype(jnp.bfloat16))
    bep = jnp.zeros((1, H_pad), jnp.float32).at[:, :H].set(
        b_enc.reshape(1, H).astype(jnp.float32))
    wdp = jnp.zeros((H_pad, D_pad), jnp.bfloat16).at[:H, :D].set(
        w_dec.astype(jnp.bfloat16))
    bdp = jnp.zeros((1, D_pad), jnp.float32).at[:, :D].set(
        b_dec.reshape(1, D).astype(jnp.float32))

    grid = (B_pad // TB,)
    kernel = functools.partial(_ksae_kernel, k=int(k), h_valid=H)

    bytes_accessed = (xp.size * 2 + wep.size * 2 + wdp.size * 2 +
                      bep.size * 4 + bdp.size * 4 +
                      B_pad * D_pad * 4 + B_pad * H_pad * 4)
    cost = pl.CostEstimate(flops=4 * B_pad * D_pad * H_pad,
                           transcendentals=B_pad * D_pad,
                           bytes_accessed=bytes_accessed)

    # TODO(synk): for very large D/H (e.g. multi-thousand SAE widths) the
    # weights should additionally be tiled along a trailing "arbitrary"
    # contraction grid axis to respect v7x's 64 MiB VMEM; at these shapes the
    # full weights fit comfortably so they use constant-index BlockSpecs.
    decoded, sparse = pl.pallas_call(
        kernel,
        out_shape=(jax.ShapeDtypeStruct((B_pad, D_pad), jnp.float32),
                   jax.ShapeDtypeStruct((B_pad, H_pad), jnp.float32)),
        grid=grid,
        in_specs=[
            pl.BlockSpec((TB, D_pad), lambda i: (i, 0)),        # x tile
            pl.BlockSpec((D_pad, H_pad), lambda i: (0, 0)),     # w_enc (const)
            pl.BlockSpec((1, H_pad), lambda i: (0, 0)),         # b_enc (const)
            pl.BlockSpec((H_pad, D_pad), lambda i: (0, 0)),     # w_dec (const)
            pl.BlockSpec((1, D_pad), lambda i: (0, 0)),         # b_dec (const)
        ],
        out_specs=(
            pl.BlockSpec((TB, D_pad), lambda i: (i, 0)),
            pl.BlockSpec((TB, H_pad), lambda i: (i, 0)),
        ),
        compiler_params=pltpu.CompilerParams(
            dimension_semantics=("parallel",)),
        cost_estimate=cost,
    )(xp, wep, bep, wdp, bdp)

    return decoded[:B, :D], sparse[:B, :H]


def _init_params(key, input_dim, hidden_dim):
    """Deterministic init mirroring torch.nn.Linear (uniform +-1/sqrt(fan_in)).

    Weights are stored pre-transposed: w_enc (D, H), w_dec (H, D)."""
    k1, k2, k3, k4 = jax.random.split(key, 4)
    bound_e = 1.0 / jnp.sqrt(float(input_dim))
    bound_d = 1.0 / jnp.sqrt(float(hidden_dim))
    w_enc = jax.random.uniform(k1, (input_dim, hidden_dim), jnp.float32,
                               -bound_e, bound_e)
    b_enc = jax.random.uniform(k2, (1, hidden_dim), jnp.float32,
                               -bound_e, bound_e)
    w_dec = jax.random.uniform(k3, (hidden_dim, input_dim), jnp.float32,
                               -bound_d, bound_d)
    b_dec = jax.random.uniform(k4, (1, input_dim), jnp.float32,
                               -bound_d, bound_d)
    return w_enc, b_enc, w_dec, b_dec


def _reference_forward(x, w_enc, b_enc, w_dec, b_dec, k):
    """Plain-JAX reference with the same bf16-operand / f32-accum numerics."""
    B = x.shape[0]
    x2 = x.reshape(B, -1)
    enc = jnp.dot(x2.astype(jnp.bfloat16), w_enc.astype(jnp.bfloat16),
                  preferred_element_type=jnp.float32) + b_enc.reshape(1, -1)
    _, topk_idx = jax.lax.top_k(enc, k)
    mask = jnp.zeros_like(enc).at[jnp.arange(B)[:, None], topk_idx].set(1.0)
    sparse = enc * mask
    dec = jnp.dot(sparse.astype(jnp.bfloat16), w_dec.astype(jnp.bfloat16),
                  preferred_element_type=jnp.float32) + b_dec.reshape(1, -1)
    return jax.nn.sigmoid(dec), sparse


def _run_case(key, batch, chan, hw, hidden_dim, k, tb):
    input_dim = chan * hw * hw
    kx, kp = jax.random.split(key)
    x = jax.random.uniform(kx, (batch, chan, hw, hw), jnp.float32)
    w_enc, b_enc, w_dec, b_dec = _init_params(kp, input_dim, hidden_dim)

    decoded, sparse = ksparse_autoencoder_forward(
        x, w_enc, b_enc, w_dec, b_dec, k, tb=tb)
    decoded = jax.block_until_ready(decoded)
    sparse = jax.block_until_ready(sparse)

    ref_dec, ref_sparse = _reference_forward(x, w_enc, b_enc, w_dec, b_dec, k)
    assert decoded.shape == (batch, input_dim)
    assert sparse.shape == (batch, hidden_dim)
    assert jnp.allclose(sparse, ref_sparse, atol=2e-3, rtol=2e-3)
    assert jnp.allclose(decoded, ref_dec, atol=2e-3, rtol=2e-3)
    # Exactly k kept per row (ties ~impossible with random f32) -> <= k holds.
    assert int(jnp.max(jnp.sum((sparse != 0).astype(jnp.int32), axis=1))) <= k


if __name__ == "__main__":
    key = jax.random.PRNGKey(0)
    k1, k2 = jax.random.split(key)

    # Module-default shapes (MNIST-like): (B,1,28,28) -> D=784, H=256, k=60.
    # tb=8 gives a 4-step batch-parallel grid to exercise the pipelining.
    _run_case(k1, batch=32, chan=1, hw=28, hidden_dim=256, k=60, tb=8)

    # Small non-128-aligned case exercising the D/H padding path.
    _run_case(k2, batch=8, chan=1, hw=8, hidden_dim=32, k=8, tb=8)

    print("KERNEL_OK")
</pallas_src>

<mosaic_0001>
module attributes {stable_mosaic.version = 11 : i64} {
  func.func @_ksae_kernel(%arg0: i32, %arg1: memref<8x896xbf16, #tpu.memory_space<vmem>>, %arg2: memref<896x256xbf16, #tpu.memory_space<vmem>>, %arg3: memref<1x256xf32, #tpu.memory_space<vmem>>, %arg4: memref<256x896xbf16, #tpu.memory_space<vmem>>, %arg5: memref<1x896xf32, #tpu.memory_space<vmem>>, %arg6: memref<8x896xf32, #tpu.memory_space<vmem>>, %arg7: memref<8x256xf32, #tpu.memory_space<vmem>>) attributes {dimension_semantics = [#tpu.dimension_semantics<parallel>], iteration_bounds = array<i64: 4>, scalar_prefetch = 0 : i64, scratch_operands = 0 : i64, tpu.core_type = #tpu.core_type<tc>, window_params = [{transform_indices = @transform_0, window_bounds = array<i64: 8, 896>}, {pipeline_mode = #tpu.pipeline_mode<synchronous>, transform_indices = @transform_1, window_bounds = array<i64: 896, 256>}, {pipeline_mode = #tpu.pipeline_mode<synchronous>, transform_indices = @transform_2, window_bounds = array<i64: 1, 256>}, {pipeline_mode = #tpu.pipeline_mode<synchronous>, transform_indices = @transform_3, window_bounds = array<i64: 256, 896>}, {pipeline_mode = #tpu.pipeline_mode<synchronous>, transform_indices = @transform_4, window_bounds = array<i64: 1, 896>}, {transform_indices = @transform_5, window_bounds = array<i64: 8, 896>}, {transform_indices = @transform_6, window_bounds = array<i64: 8, 256>}]} {
    %c0 = arith.constant 0 : index
    %c0_0 = arith.constant 0 : index
    %0 = vector.load %arg1[%c0, %c0_0] : memref<8x896xbf16, #tpu.memory_space<vmem>>, vector<8x896xbf16>
    %c0_1 = arith.constant 0 : index
    %c0_2 = arith.constant 0 : index
    %1 = vector.load %arg2[%c0_1, %c0_2] : memref<896x256xbf16, #tpu.memory_space<vmem>>, vector<896x256xbf16>
    %cst = arith.constant dense<0.000000e+00> : vector<8x256xf32>
    %2 = tpu.matmul %0, %1, %cst {dimension_numbers = #tpu.dot_dimension_numbers<[1], [0], [0], [1], [0, 0, 1, 1], [], []>} : vector<8x896xbf16>, vector<896x256xbf16>, vector<8x256xf32> -> vector<8x256xf32>
    %c0_3 = arith.constant 0 : index
    %c0_4 = arith.constant 0 : index
    %3 = vector.load %arg3[%c0_3, %c0_4] : memref<1x256xf32, #tpu.memory_space<vmem>>, vector<1x256xf32>
    %4 = vector.broadcast %3 : vector<1x256xf32> to vector<8x256xf32>
    %5 = arith.addf %2, %4 : vector<8x256xf32>
    %6 = tpu.iota {dimensions = array<i32: 1>} : vector<8x256xi32>
    %cst_5 = arith.constant 0xFF800000 : f32
    %c0_i32 = arith.constant 0 : i32
    %c60_i32 = arith.constant 60 : i32
    %7 = arith.addi %c0_i32, %c60_i32 : i32
    %c1_i32 = arith.constant 1 : i32
    %8 = scf.for %arg8 = %c0_i32 to %7 step %c1_i32 iter_args(%arg9 = %5) -> (vector<8x256xf32>)  : i32 {
      %cst_18 = arith.constant dense<0xFF800000> : vector<8xf32>
      %26 = vector.multi_reduction <maximumf>, %arg9, %cst_18 [1] : vector<8x256xf32> to vector<8xf32>
      %27 = vector.shape_cast %26 : vector<8xf32> to vector<8x1xf32>
      %28 = vector.broadcast %27 : vector<8x1xf32> to vector<8x256xf32>
      %29 = arith.cmpf oeq, %arg9, %28 : vector<8x256xf32>
      %c256_i32 = arith.constant 256 : i32
      %30 = vector.broadcast %c256_i32 : i32 to vector<8x256xi32>
      %31 = arith.select %29, %6, %30 : vector<8x256xi1>, vector<8x256xi32>
      %cst_19 = arith.constant dense<2147483647> : vector<8xi32>
      %32 = vector.multi_reduction <minsi>, %31, %cst_19 [1] : vector<8x256xi32> to vector<8xi32>
      %33 = vector.shape_cast %32 : vector<8xi32> to vector<8x1xi32>
      %34 = vector.broadcast %33 : vector<8x1xi32> to vector<8x256xi32>
      %35 = arith.cmpi eq, %6, %34 : vector<8x256xi32>
      %36 = vector.broadcast %cst_5 : f32 to vector<8x256xf32>
      %37 = arith.select %35, %36, %arg9 : vector<8x256xi1>, vector<8x256xf32>
      scf.yield %37 : vector<8x256xf32>
    }
    %cst_6 = arith.constant 0xFF800000 : f32
    %9 = vector.broadcast %cst_6 : f32 to vector<8x256xf32>
    %10 = arith.cmpf oeq, %8, %9 : vector<8x256xf32>
    %cst_7 = arith.constant 0.000000e+00 : f32
    %11 = vector.broadcast %cst_7 : f32 to vector<8x256xf32>
    %12 = arith.select %10, %5, %11 : vector<8x256xi1>, vector<8x256xf32>
    %13 = arith.truncf %12 : vector<8x256xf32> to vector<8x256xbf16>
    %c0_8 = arith.constant 0 : index
    %c0_9 = arith.constant 0 : index
    %14 = vector.load %arg4[%c0_8, %c0_9] : memref<256x896xbf16, #tpu.memory_space<vmem>>, vector<256x896xbf16>
    %cst_10 = arith.constant dense<0.000000e+00> : vector<8x896xf32>
    %15 = tpu.matmul %13, %14, %cst_10 {dimension_numbers = #tpu.dot_dimension_numbers<[1], [0], [0], [1], [0, 0, 1, 1], [], []>} : vector<8x256xbf16>, vector<256x896xbf16>, vector<8x896xf32> -> vector<8x896xf32>
    %c0_11 = arith.constant 0 : index
    %c0_12 = arith.constant 0 : index
    %16 = vector.load %arg5[%c0_11, %c0_12] : memref<1x896xf32, #tpu.memory_space<vmem>>, vector<1x896xf32>
    %17 = vector.broadcast %16 : vector<1x896xf32> to vector<8x896xf32>
    %18 = arith.addf %15, %17 : vector<8x896xf32>
    %19 = arith.negf %18 : vector<8x896xf32>
    %20 = math.exp %19 : vector<8x896xf32>
    %cst_13 = arith.constant 1.000000e+00 : f32
    %21 = vector.broadcast %cst_13 : f32 to vector<8x896xf32>
    %22 = arith.addf %21, %20 : vector<8x896xf32>
    %23 = arith.divf %21, %22 : vector<8x896xf32>
    %c0_14 = arith.constant 0 : index
    %c0_15 = arith.constant 0 : index
    %24 = vector.load %arg6[%c0_14, %c0_15] : memref<8x896xf32, #tpu.memory_space<vmem>>, vector<8x896xf32>
    tpu.vector_store %arg6[%c0_14, %c0_15], %23 {strides = array<i32>} : memref<8x896xf32, #tpu.memory_space<vmem>>, vector<8x896xf32>,
    %c0_16 = arith.constant 0 : index
    %c0_17 = arith.constant 0 : index
    %25 = vector.load %arg7[%c0_16, %c0_17] : memref<8x256xf32, #tpu.memory_space<vmem>>, vector<8x256xf32>
    tpu.vector_store %arg7[%c0_16, %c0_17], %12 {strides = array<i32>} : memref<8x256xf32, #tpu.memory_space<vmem>>, vector<8x256xf32>,
    return
  }
  func.func @transform_0(%arg0: i32) -> (i32, i32) {
    %c0_i32 = arith.constant 0 : i32
    %c0_i32_0 = arith.constant 0 : i32
    return %arg0, %c0_i32 : i32, i32
  }
  func.func @transform_1(%arg0: i32) -> (i32, i32) {
    %c0_i32 = arith.constant 0 : i32
    %c0_i32_0 = arith.constant 0 : i32
    %c0_i32_1 = arith.constant 0 : i32
    return %c0_i32, %c0_i32_0 : i32, i32
  }
  func.func @transform_2(%arg0: i32) -> (i32, i32) {
    %c0_i32 = arith.constant 0 : i32
    %c0_i32_0 = arith.constant 0 : i32
    %c0_i32_1 = arith.constant 0 : i32
    return %c0_i32, %c0_i32_0 : i32, i32
  }
  func.func @transform_3(%arg0: i32) -> (i32, i32) {
    %c0_i32 = arith.constant 0 : i32
    %c0_i32_0 = arith.constant 0 : i32
    %c0_i32_1 = arith.constant 0 : i32
    return %c0_i32, %c0_i32_0 : i32, i32
  }
  func.func @transform_4(%arg0: i32) -> (i32, i32) {
    %c0_i32 = arith.constant 0 : i32
    %c0_i32_0 = arith.constant 0 : i32
    %c0_i32_1 = arith.constant 0 : i32
    return %c0_i32, %c0_i32_0 : i32, i32
  }
  func.func @transform_5(%arg0: i32) -> (i32, i32) {
    %c0_i32 = arith.constant 0 : i32
    %c0_i32_0 = arith.constant 0 : i32
    return %arg0, %c0_i32 : i32, i32
  }
  func.func @transform_6(%arg0: i32) -> (i32, i32) {
    %c0_i32 = arith.constant 0 : i32
    %c0_i32_0 = arith.constant 0 : i32
    return %arg0, %c0_i32 : i32, i32
  }
}

</mosaic_0001>

<llo_original>
// kernel: tpu_custom_call.1
$region0: #{tpu_custom_call.1}
  #allocation0 [shape = 'u32[]', space=smem, size = 0x4, offset = 0x4, fixed_abs, tag = 'smem constant byte address 0x4 - core index']
  #allocation1 [shape = 'u32[72,128]{1,0:T(1,128)}', space=vmem, size = 0x9000, scoped, tag = 'internal scratch']
  %s0 = inlined_call_operand.hbm [shape: bf16[32,896], index: 0, kind: input, shape index: {}]
  %s1 = inlined_call_operand.hbm [shape: bf16[896,256], index: 1, kind: input, shape index: {}]
  %s2 = inlined_call_operand.hbm [shape: f32[1,256], index: 2, kind: input, shape index: {}]
  %s3 = inlined_call_operand.hbm [shape: bf16[256,896], index: 3, kind: input, shape index: {}]
  %s4 = inlined_call_operand.hbm [shape: f32[1,896], index: 4, kind: input, shape index: {}]
  %s5 = inlined_call_operand.hbm [shape: f32[32,896], index: 5, kind: output, shape index: {0}]
  %s6 = inlined_call_operand.hbm [shape: f32[32,256], index: 6, kind: output, shape index: {1}]
  %7 = xla_tuple %s5, %s6
  %s8 = sld [smem:[#allocation0]]
  $region88: #{tpu_custom_call.1} parent=0
    _
  %s10 = ssub.s32 1, %s8
  %s11 = scalar_select 0, %s10, %s8
  $region1: #{tpu_custom_call.1} parent=0
    #allocation2 [shape = 'u8[28672]{0}', space=vmem, size = 0x7000, scoped, tag = 'input window, operand 0']
    #allocation3 [shape = 's32[2]{0}', space=sflag, size = 0x8, scoped, tag = 'scoped memory for tpu_custom_call.1']
    #allocation4 [shape = 's32[2]{0}', space=sflag, size = 0x8, scoped, tag = 'scoped memory for tpu_custom_call.1']
    #allocation5 [shape = 'u8[458752]{0}', space=vmem, size = 0x70000, scoped, tag = 'input window, operand 1, single buffered']
    #allocation6 [shape = 's32[1]{0}', space=sflag, size = 0x4, scoped, tag = 'scoped memory for tpu_custom_call.1']
    #allocation7 [shape = 'u8[1024]{0}', space=vmem, size = 0x400, scoped, tag = 'input window, operand 2, single buffered']
    #allocation8 [shape = 'u8[458752]{0}', space=vmem, size = 0x70000, scoped, tag = 'input window, operand 3, single buffered']
    #allocation9 [shape = 's32[1]{0}', space=sflag, size = 0x4, scoped, tag = 'scoped memory for tpu_custom_call.1']
    #allocation10 [shape = 'u8[3584]{0}', space=vmem, size = 0x1000, scoped, tag = 'input window, operand 4, single buffered']
    #allocation11 [shape = 'u8[57344]{0}', space=vmem, size = 0xe000, scoped, tag = 'output window, operand 0']
    #allocation12 [shape = 'u8[16384]{0}', space=vmem, size = 0x4000, scoped, tag = 'output window, operand 1']
    #allocation13 [shape = 's32[2]{0}', space=sflag, size = 0x8, scoped, tag = 'scoped memory for tpu_custom_call.1']
    %12 = vsyncpa [#allocation3], 0
    %s13 = scalar_lea.sflag [#allocation3], 1
    %14 = vsyncpa %s13, 0
    %15 = vsyncpa [#allocation6], 0
    %16 = vsyncpa [#allocation9], 0
    %17 = vsyncpa [#allocation4], 0
    %s18 = scalar_lea.sflag [#allocation4], 1
    %19 = vsyncpa %s18, 0
    %20 = vsyncpa [#allocation13], 0
    %s21 = scalar_lea.sflag [#allocation13], 1
    %22 = vsyncpa %s21, 0
    loop: start=0, step=1, limit=6
    $region2: #{tpu_custom_call.1} parent=1 // loop_pre_header
      _
    $region3: #{tpu_custom_call.1} parent=1 // loop_header
      %s24 = sphi 0, %s28
      %p25 = scmp.ge.s32.totalorder %s24, 6
      %s34 = sphi 0, %s36
      %s37 = sphi 0, %s34
      %s38 = sphi 0, %s37
      %s54 = sphi 0, %s38
      %s58 = sphi 0, %s58
      %s60 = sphi 0, %s58
      %s61 = sphi 0, %s60
      %s75 = sphi 0, %s61
      %s79 = sphi 0, %s79
      %s81 = sphi 0, %s79
      %s82 = sphi 0, %s81
      %s96 = sphi 0, %s82
      %s100 = sphi 0, %s100
      %s102 = sphi 0, %s100
      %s103 = sphi 0, %s102
      %s117 = sphi 0, %s103
      %s121 = sphi 0, %s121
      %s123 = sphi 0, %s121
      %s124 = sphi 0, %s123
      %s138 = sphi 0, %s124
      %s144 = sphi 0, %s146
      %s147 = sphi 0, %s144
      %s148 = sphi 0, %s147
      %s164 = sphi 0, %s148
      %s170 = sphi 0, %s172
      %s173 = sphi 0, %s170
      %s174 = sphi 0, %s173
      %s190 = sphi 0, %s174
    $region4: #{tpu_custom_call.1} parent=1 // loop_header_branch
      %27 = sbr.rel (%p25) target = $region8
    $region5: #{tpu_custom_call.1} parent=1 // loop_body
      %s29 = ssub.s32 %s24, 1
      %s30 = ssub.s32 %s24, 2
      %s31 = sadd.s32 %s24, 1
      %s32 = ssub.s32 %s24, %s31
      %p33 = scmp.eq.s32.totalorder %s32, 0
      %s35 = sadd.s32 %s34, 1
      %s36 = scalar_select %p33, %s34, %s35
      %p39 = pneg %p33
      %p40 = scmp.eq.s32.totalorder %s24, 3
      %p41 = por %p39, %p40
      %p42 = scmp.ne.s32.totalorder %s34, %s37
      %p43 = scmp.eq.s32.totalorder %s24, 0
      %p44 = por %p42, %p43
      %p45 = scmp.ne.s32.totalorder %s34, %s37
      %p46 = scmp.eq.s32.totalorder %s29, 3
      %p47 = por %p45, %p46
      %p48 = scmp.ne.s32.totalorder %s37, %s38
      %p49 = scmp.eq.s32.totalorder %s29, 0
      %p50 = por %p48, %p49
      %p51 = scmp.ne.s32.totalorder %s37, %s38
      %p52 = scmp.eq.s32.totalorder %s30, 3
      %p53 = por %p51, %p52
      %p55 = scmp.ne.s32.totalorder %s38, %s54
      %p56 = scmp.eq.s32.totalorder %s30, 0
      %p57 = por %p55, %p56
      %s59 = sadd.s32 %s58, 1
      %p62 = scmp.eq.s32.totalorder %s24, 3
      %p63 = scmp.ne.s32.totalorder %s58, %s60
      %p64 = scmp.eq.s32.totalorder %s24, 0
      %p65 = por %p63, %p64
      %p66 = scmp.ne.s32.totalorder %s58, %s60
      %p67 = scmp.eq.s32.totalorder %s29, 3
      %p68 = por %p66, %p67
      %p69 = scmp.ne.s32.totalorder %s60, %s61
      %p70 = scmp.eq.s32.totalorder %s29, 0
      %p71 = por %p69, %p70
      %p72 = scmp.ne.s32.totalorder %s60, %s61
      %p73 = scmp.eq.s32.totalorder %s30, 3
      %p74 = por %p72, %p73
      %p76 = scmp.ne.s32.totalorder %s61, %s75
      %p77 = scmp.eq.s32.totalorder %s30, 0
      %p78 = por %p76, %p77
      %s80 = sadd.s32 %s79, 1
      %p83 = scmp.eq.s32.totalorder %s24, 3
      %p84 = scmp.ne.s32.totalorder %s79, %s81
      %p85 = scmp.eq.s32.totalorder %s24, 0
      %p86 = por %p84, %p85
      %p87 = scmp.ne.s32.totalorder %s79, %s81
      %p88 = scmp.eq.s32.totalorder %s29, 3
      %p89 = por %p87, %p88
      %p90 = scmp.ne.s32.totalorder %s81, %s82
      %p91 = scmp.eq.s32.totalorder %s29, 0
      %p92 = por %p90, %p91
      %p93 = scmp.ne.s32.totalorder %s81, %s82
      %p94 = scmp.eq.s32.totalorder %s30, 3
      %p95 = por %p93, %p94
      %p97 = scmp.ne.s32.totalorder %s82, %s96
      %p98 = scmp.eq.s32.totalorder %s30, 0
      %p99 = por %p97, %p98
      %s101 = sadd.s32 %s100, 1
      %p104 = scmp.eq.s32.totalorder %s24, 3
      %p105 = scmp.ne.s32.totalorder %s100, %s102
      %p106 = scmp.eq.s32.totalorder %s24, 0
      %p107 = por %p105, %p106
      %p108 = scmp.ne.s32.totalorder %s100, %s102
      %p109 = scmp.eq.s32.totalorder %s29, 3
      %p110 = por %p108, %p109
      %p111 = scmp.ne.s32.totalorder %s102, %s103
      %p112 = scmp.eq.s32.totalorder %s29, 0
      %p113 = por %p111, %p112
      %p114 = scmp.ne.s32.totalorder %s102, %s103
      %p115 = scmp.eq.s32.totalorder %s30, 3
      %p116 = por %p114, %p115
      %p118 = scmp.ne.s32.totalorder %s103, %s117
      %p119 = scmp.eq.s32.totalorder %s30, 0
      %p120 = por %p118, %p119
      %s122 = sadd.s32 %s121, 1
      %p125 = scmp.eq.s32.totalorder %s24, 3
      %p126 = scmp.ne.s32.totalorder %s121, %s123
      %p127 = scmp.eq.s32.totalorder %s24, 0
      %p128 = por %p126, %p127
      %p129 = scmp.ne.s32.totalorder %s121, %s123
      %p130 = scmp.eq.s32.totalorder %s29, 3
      %p131 = por %p129, %p130
      %p132 = scmp.ne.s32.totalorder %s123, %s124
      %p133 = scmp.eq.s32.totalorder %s29, 0
      %p134 = por %p132, %p133
      %p135 = scmp.ne.s32.totalorder %s123, %s124
      %p136 = scmp.eq.s32.totalorder %s30, 3
      %p137 = por %p135, %p136
      %p139 = scmp.ne.s32.totalorder %s124, %s138
      %p140 = scmp.eq.s32.totalorder %s30, 0
      %p141 = por %p139, %p140
      %s142 = ssub.s32 %s24, %s31
      %p143 = scmp.eq.s32.totalorder %s142, 0
      %s145 = sadd.s32 %s144, 1
      %s146 = scalar_select %p143, %s144, %s145
      %p149 = pneg %p143
      %p150 = scmp.eq.s32.totalorder %s24, 3
      %p151 = por %p149, %p150
      %p152 = scmp.ne.s32.totalorder %s144, %s147
      %p153 = scmp.eq.s32.totalorder %s24, 0
      %p154 = por %p152, %p153
      %p155 = scmp.ne.s32.totalorder %s144, %s147
      %p156 = scmp.eq.s32.totalorder %s29, 3
      %p157 = por %p155, %p156
      %p158 = scmp.ne.s32.totalorder %s147, %s148
      %p159 = scmp.eq.s32.totalorder %s29, 0
      %p160 = por %p158, %p159
      %p161 = scmp.ne.s32.totalorder %s147, %s148
      %p162 = scmp.eq.s32.totalorder %s30, 3
      %p163 = por %p161, %p162
      %p165 = scmp.ne.s32.totalorder %s148, %s164
      %p166 = scmp.eq.s32.totalorder %s30, 0
      %p167 = por %p165, %p166
      %s168 = ssub.s32 %s24, %s31
      %p169 = scmp.eq.s32.totalorder %s168, 0
      %s171 = sadd.s32 %s170, 1
      %s172 = scalar_select %p169, %s170, %s171
      %p175 = pneg %p169
      %p176 = scmp.eq.s32.totalorder %s24, 3
      %p177 = por %p175, %p176
      %p178 = scmp.ne.s32.totalorder %s170, %s173
      %p179 = scmp.eq.s32.totalorder %s24, 0
      %p180 = por %p178, %p179
      %p181 = scmp.ne.s32.totalorder %s170, %s173
      %p182 = scmp.eq.s32.totalorder %s29, 3
      %p183 = por %p181, %p182
      %p184 = scmp.ne.s32.totalorder %s173, %s174
      %p185 = scmp.eq.s32.totalorder %s29, 0
      %p186 = por %p184, %p185
      %p187 = scmp.ne.s32.totalorder %s173, %s174
      %p188 = scmp.eq.s32.totalorder %s30, 3
      %p189 = por %p187, %p188
      %p191 = scmp.ne.s32.totalorder %s174, %s190
      %p192 = scmp.eq.s32.totalorder %s30, 0
      %p193 = por %p191, %p192
      %p194 = scmp.le.s32.totalorder 1, %s24
      %p195 = scmp.lt.s32.totalorder %s24, 5
      %p196 = pnand %p194, %p195
      %p197 = pneg %p196
      // Predicated region
      $region9: #{tpu_custom_call.1} parent=5 // pred_check
        _
      $region10: #{tpu_custom_call.1} parent=5 // pred_check_branch
        %199 = sbr.rel (%p196) target = $region12
      $region11: #{tpu_custom_call.1} parent=5 // pred_region
        %s200 = ssub.s32 %s24, 1
        // Predicated region
        $region13: #{tpu_custom_call.1} parent=11 // pred_check
          %p201 = pneg %p71
        $region14: #{tpu_custom_call.1} parent=11 // pred_check_branch
          %203 = sbr.rel (%p201) target = $region16
        $region15: #{tpu_custom_call.1} parent=11 // pred_region
          %205 = vsyncadd [#allocation6], 0
          %s206 = sshll.u32 %s1, 4
          %s207 = int_to_ptr.hbm [resolvable:$true] %s206
          %s208 = sshll.u32 [#allocation5], 4
          %s209 = int_to_ptr.vmem [resolvable:$true] %s208
          %214 = dma.hbm_to_vmem [thread:$0]  %s207, 14336, %s209, [#allocation6], 128, 128, 8
        $region16: #{tpu_custom_call.1} parent=11 // pred_fallthru
          _
        // Predicated region
        $region17: #{tpu_custom_call.1} parent=11 // pred_check
          %p215 = pneg %p92
        $region18: #{tpu_custom_call.1} parent=11 // pred_check_branch
          %217 = sbr.rel (%p215) target = $region20
        $region19: #{tpu_custom_call.1} parent=11 // pred_region
          %219 = vsyncadd [#allocation6], 0
          %s221 = sshll.u32 %s2, 4
          %s222 = int_to_ptr.hbm [resolvable:$true] %s221
          %s223 = sshll.u32 [#allocation7], 4
          %s224 = int_to_ptr.vmem [resolvable:$true] %s223
          %226 = dma.hbm_to_vmem [thread:$0]  %s222, 32, %s224, [#allocation6]
        $region20: #{tpu_custom_call.1} parent=11 // pred_fallthru
          _
        // Predicated region
        $region21: #{tpu_custom_call.1} parent=11 // pred_check
          %p227 = pneg %p113
        $region22: #{tpu_custom_call.1} parent=11 // pred_check_branch
          %229 = sbr.rel (%p227) target = $region24
        $region23: #{tpu_custom_call.1} parent=11 // pred_region
          %231 = vsyncadd [#allocation9], 0
          %s232 = sshll.u32 %s3, 4
          %s233 = int_to_ptr.hbm [resolvable:$true] %s232
          %s234 = sshll.u32 [#allocation8], 4
          %s235 = int_to_ptr.vmem [resolvable:$true] %s234
          %240 = dma.hbm_to_vmem [thread:$0]  %s233, 14336, %s235, [#allocation9], 448, 448, 28
        $region24: #{tpu_custom_call.1} parent=11 // pred_fallthru
          _
        // Predicated region
        $region25: #{tpu_custom_call.1} parent=11 // pred_check
          %p241 = pneg %p134
        $region26: #{tpu_custom_call.1} parent=11 // pred_check_branch
          %243 = sbr.rel (%p241) target = $region28
        $region27: #{tpu_custom_call.1} parent=11 // pred_region
          %245 = vsyncadd [#allocation9], 0
          %s247 = sshll.u32 %s4, 4
          %s248 = int_to_ptr.hbm [resolvable:$true] %s247
          %s249 = sshll.u32 [#allocation10], 4
          %s250 = int_to_ptr.vmem [resolvable:$true] %s249
          %252 = dma.hbm_to_vmem [thread:$0]  %s248, 112, %s250, [#allocation9]
        $region28: #{tpu_custom_call.1} parent=11 // pred_fallthru
          _
      $region12: #{tpu_custom_call.1} parent=5 // pred_fallthru
        _
      %p253 = scmp.lt.s32.totalorder %s24, 4
      // Predicated region
      $region29: #{tpu_custom_call.1} parent=5 // pred_check
        %p254 = pneg %p253
      $region30: #{tpu_custom_call.1} parent=5 // pred_check_branch
        %256 = sbr.rel (%p254) target = $region32
      $region31: #{tpu_custom_call.1} parent=5 // pred_region
        // Predicated region
        $region33: #{tpu_custom_call.1} parent=31 // pred_check
          %p257 = pneg %p44
        $region34: #{tpu_custom_call.1} parent=31 // pred_check_branch
          %259 = sbr.rel (%p257) target = $region36
        $region35: #{tpu_custom_call.1} parent=31 // pred_region
          %s260 = sand.u32 %s34, 1
          %s261 = scalar_lea.sflag [#allocation3], %s260
          %s262 = sand.u32 %s34, 1
          %s263 = smul.addr %s262, 28
          %s264 = scalar_lea.vmem [#allocation2], %s263
          %266 = vsyncadd %s261, 0
          %s267 = smul.addr %s24, 7
          %s268 = smul.addr %s267, 4
          %s269 = scalar_lea.hbm %s0, %s268
          %s271 = sshll.u32 %s269, 4
          %s272 = int_to_ptr.hbm [resolvable:$true] %s271
          %s273 = sshll.u32 %s264, 4
          %s274 = int_to_ptr.vmem [resolvable:$true] %s273
          %276 = dma.hbm_to_vmem [thread:$0]  %s272, 448, %s274, %s261
        $region36: #{tpu_custom_call.1} parent=31 // pred_fallthru
          _
      $region32: #{tpu_custom_call.1} parent=5 // pred_fallthru
        _
      %p277 = scmp.le.s32.totalorder 1, %s24
      %p278 = scmp.lt.s32.totalorder %s24, 5
      %p279 = pnand %p277, %p278
      %p280 = pneg %p279
      // Predicated region
      $region37: #{tpu_custom_call.1} parent=5 // pred_check
        _
      $region38: #{tpu_custom_call.1} parent=5 // pred_check_branch
        %282 = sbr.rel (%p279) target = $region40
      $region39: #{tpu_custom_call.1} parent=5 // pred_region
        %s283 = ssub.s32 %s24, 1
        %s284 = sand.u32 %s37, 1
        %s285 = scalar_lea.sflag [#allocation3], %s284
        %s286 = sand.u32 %s37, 1
        %s287 = smul.addr %s286, 28
        %s288 = scalar_lea.vmem [#allocation2], %s287
        // Predicated region
        $region41: #{tpu_custom_call.1} parent=39 // pred_check
          %p289 = pneg %p50
        $region42: #{tpu_custom_call.1} parent=39 // pred_check_branch
          %291 = sbr.rel (%p289) target = $region44
        $region43: #{tpu_custom_call.1} parent=39 // pred_region
          %293 = dma.done %s285, 448
        $region44: #{tpu_custom_call.1} parent=39 // pred_fallthru
          _
        // Predicated region
        $region45: #{tpu_custom_call.1} parent=39 // pred_check
          %p294 = pneg %p71
        $region46: #{tpu_custom_call.1} parent=39 // pred_check_branch
          %296 = sbr.rel (%p294) target = $region48
        $region47: #{tpu_custom_call.1} parent=39 // pred_region
          %298 = dma.done [#allocation6], 14336
        $region48: #{tpu_custom_call.1} parent=39 // pred_fallthru
          _
        // Predicated region
        $region49: #{tpu_custom_call.1} parent=39 // pred_check
          %p299 = pneg %p92
        $region50: #{tpu_custom_call.1} parent=39 // pred_check_branch
          %301 = sbr.rel (%p299) target = $region52
        $region51: #{tpu_custom_call.1} parent=39 // pred_region
          %303 = dma.done [#allocation6], 32
        $region52: #{tpu_custom_call.1} parent=39 // pred_fallthru
          _
        // Predicated region
        $region53: #{tpu_custom_call.1} parent=39 // pred_check
          %p304 = pneg %p113
        $region54: #{tpu_custom_call.1} parent=39 // pred_check_branch
          %306 = sbr.rel (%p304) target = $region56
        $region55: #{tpu_custom_call.1} parent=39 // pred_region
          %308 = dma.done [#allocation9], 14336
        $region56: #{tpu_custom_call.1} parent=39 // pred_fallthru
          _
        // Predicated region
        $region57: #{tpu_custom_call.1} parent=39 // pred_check
          %p309 = pneg %p134
        $region58: #{tpu_custom_call.1} parent=39 // pred_check_branch
          %311 = sbr.rel (%p309) target = $region60
        $region59: #{tpu_custom_call.1} parent=39 // pred_region
          %313 = dma.done [#allocation9], 112
        $region60: #{tpu_custom_call.1} parent=39 // pred_fallthru
          _
        %s314 = sand.u32 %s37, 1
        %s315 = scalar_lea.sflag [#allocation3], %s314
        %s316 = sand.u32 %s37, 1
        %s317 = smul.addr %s316, 28
        %s318 = scalar_lea.vmem [#allocation2], %s317
        %p319 = pneg %p50
        %p320 = pneg %p47
        %p321 = pneg %p71
        %p322 = pneg %p68
        %p323 = pneg %p92
        %p324 = pneg %p89
        %p325 = pneg %p113
        %p326 = pneg %p110
        %p327 = pneg %p134
        %p328 = pneg %p131
        %p329 = pneg %p160
        %p330 = pneg %p157
        %s331 = sand.u32 %s147, 1
        %s332 = scalar_lea.sflag [#allocation4], %s331
        %s333 = sand.u32 %s147, 1
        %s334 = smul.addr %s333, 56
        %s335 = scalar_lea.vmem [#allocation11], %s334
        %p336 = pneg %p186
        %p337 = pneg %p183
        %s338 = sand.u32 %s173, 1
        %s339 = scalar_lea.sflag [#allocation13], %s338
        %s340 = sand.u32 %s173, 1
        %s341 = smul.addr %s340, 16
        %s342 = scalar_lea.vmem [#allocation12], %s341
        %v343 = vld [vmem:[%s288] sm:$0xff]
        %v344 = vld [vmem:[%s288 + $0x8] sm:$0xff]
        %v345 = vld [vmem:[%s288 + $0x10] sm:$0xff]
        %v346 = vld [vmem:[%s288 + $0x18] sm:$0xf]
        %v347 = vld [vmem:[#allocation5] sm:$0xff]
        %v348 = vld [vmem:[#allocation5 + $0x8] sm:$0xff]
        %v349 = vld [vmem:[#allocation5 + $0x10] sm:$0xff]
        %v350 = vld [vmem:[#allocation5 + $0x18] sm:$0xff]
        %v351 = vld [vmem:[#allocation5 + $0x20] sm:$0xff]
        %v352 = vld [vmem:[#allocation5 + $0x28] sm:$0xff]
        %v353 = vld [vmem:[#allocation5 + $0x30] sm:$0xff]
        %v354 = vld [vmem:[#allocation5 + $0x38] sm:$0xff]
        %v355 = vld [vmem:[#allocation5 + $0x40] sm:$0xff]
        %v356 = vld [vmem:[#allocation5 + $0x48] sm:$0xff]
        %v357 = vld [vmem:[#allocation5 + $0x50] sm:$0xff]
        %v358 = vld [vmem:[#allocation5 + $0x58] sm:$0xff]
        %v359 = vld [vmem:[#allocation5 + $0x60] sm:$0xff]
        %v360 = vld [vmem:[#allocation5 + $0x68] sm:$0xff]
        %v361 = vld [vmem:[#allocation5 + $0x70] sm:$0xff]
        %v362 = vld [vmem:[#allocation5 + $0x78] sm:$0xff]
        %v363 = vld [vmem:[#allocation5 + $0x80] sm:$0xff]
        %v364 = vld [vmem:[#allocation5 + $0x88] sm:$0xff]
        %v365 = vld [vmem:[#allocation5 + $0x90] sm:$0xff]
        %v366 = vld [vmem:[#allocation5 + $0x98] sm:$0xff]
        %v367 = vld [vmem:[#allocation5 + $0xa0] sm:$0xff]
        %v368 = vld [vmem:[#allocation5 + $0xa8] sm:$0xff]
        %v369 = vld [vmem:[#allocation5 + $0xb0] sm:$0xff]
        %v370 = vld [vmem:[#allocation5 + $0xb8] sm:$0xff]
        %v371 = vld [vmem:[#allocation5 + $0xc0] sm:$0xff]
        %v372 = vld [vmem:[#allocation5 + $0xc8] sm:$0xff]
        %v373 = vld [vmem:[#allocation5 + $0xd0] sm:$0xff]
        %v374 = vld [vmem:[#allocation5 + $0xd8] sm:$0xff]
        %v375 = vld [vmem:[#allocation5 + $0xe0] sm:$0xff]
        %v376 = vld [vmem:[#allocation5 + $0xe8] sm:$0xff]
        %v377 = vld [vmem:[#allocation5 + $0xf0] sm:$0xff]
        %v378 = vld [vmem:[#allocation5 + $0xf8] sm:$0xff]
        %v379 = vld [vmem:[#allocation5 + $0x100] sm:$0xff]
        %v380 = vld [vmem:[#allocation5 + $0x108] sm:$0xff]
        %v381 = vld [vmem:[#allocation5 + $0x110] sm:$0xff]
        %v382 = vld [vmem:[#allocation5 + $0x118] sm:$0xff]
        %v383 = vld [vmem:[#allocation5 + $0x120] sm:$0xff]
        %v384 = vld [vmem:[#allocation5 + $0x128] sm:$0xff]
        %v385 = vld [vmem:[#allocation5 + $0x130] sm:$0xff]
        %v386 = vld [vmem:[#allocation5 + $0x138] sm:$0xff]
        %v387 = vld [vmem:[#allocation5 + $0x140] sm:$0xff]
        %v388 = vld [vmem:[#allocation5 + $0x148] sm:$0xff]
        %v389 = vld [vmem:[#allocation5 + $0x150] sm:$0xff]
        %v390 = vld [vmem:[#allocation5 + $0x158] sm:$0xff]
        %v391 = vld [vmem:[#allocation5 + $0x160] sm:$0xff]
        %v392 = vld [vmem:[#allocation5 + $0x168] sm:$0xff]
        %v393 = vld [vmem:[#allocation5 + $0x170] sm:$0xff]
        %v394 = vld [vmem:[#allocation5 + $0x178] sm:$0xff]
        %v395 = vld [vmem:[#allocation5 + $0x180] sm:$0xff]
        %v396 = vld [vmem:[#allocation5 + $0x188] sm:$0xff]
        %v397 = vld [vmem:[#allocation5 + $0x190] sm:$0xff]
        %v398 = vld [vmem:[#allocation5 + $0x198] sm:$0xff]
        %v399 = vld [vmem:[#allocation5 + $0x1a0] sm:$0xff]
        %v400 = vld [vmem:[#allocation5 + $0x1a8] sm:$0xff]
        %v401 = vld [vmem:[#allocation5 + $0x1b0] sm:$0xff]
        %v402 = vld [vmem:[#allocation5 + $0x1b8] sm:$0xff]
        %v403 = vld [vmem:[#allocation5 + $0x1c0] sm:$0xff]
        %v404 = vld [vmem:[#allocation5 + $0x1c8] sm:$0xff]
        %v405 = vld [vmem:[#allocation5 + $0x1d0] sm:$0xff]
        %v406 = vld [vmem:[#allocation5 + $0x1d8] sm:$0xff]
        %v407 = vld [vmem:[#allocation5 + $0x1e0] sm:$0xff]
        %v408 = vld [vmem:[#allocation5 + $0x1e8] sm:$0xff]
        %v409 = vld [vmem:[#allocation5 + $0x1f0] sm:$0xff]
        %v410 = vld [vmem:[#allocation5 + $0x1f8] sm:$0xff]
        %v411 = vld [vmem:[#allocation5 + $0x200] sm:$0xff]
        %v412 = vld [vmem:[#allocation5 + $0x208] sm:$0xff]
        %v413 = vld [vmem:[#allocation5 + $0x210] sm:$0xff]
        %v414 = vld [vmem:[#allocation5 + $0x218] sm:$0xff]
        %v415 = vld [vmem:[#allocation5 + $0x220] sm:$0xff]
        %v416 = vld [vmem:[#allocation5 + $0x228] sm:$0xff]
        %v417 = vld [vmem:[#allocation5 + $0x230] sm:$0xff]
        %v418 = vld [vmem:[#allocation5 + $0x238] sm:$0xff]
        %v419 = vld [vmem:[#allocation5 + $0x240] sm:$0xff]
        %v420 = vld [vmem:[#allocation5 + $0x248] sm:$0xff]
        %v421 = vld [vmem:[#allocation5 + $0x250] sm:$0xff]
        %v422 = vld [vmem:[#allocation5 + $0x258] sm:$0xff]
        %v423 = vld [vmem:[#allocation5 + $0x260] sm:$0xff]
        %v424 = vld [vmem:[#allocation5 + $0x268] sm:$0xff]
        %v425 = vld [vmem:[#allocation5 + $0x270] sm:$0xff]
        %v426 = vld [vmem:[#allocation5 + $0x278] sm:$0xff]
        %v427 = vld [vmem:[#allocation5 + $0x280] sm:$0xff]
        %v428 = vld [vmem:[#allocation5 + $0x288] sm:$0xff]
        %v429 = vld [vmem:[#allocation5 + $0x290] sm:$0xff]
        %v430 = vld [vmem:[#allocation5 + $0x298] sm:$0xff]
        %v431 = vld [vmem:[#allocation5 + $0x2a0] sm:$0xff]
        %v432 = vld [vmem:[#allocation5 + $0x2a8] sm:$0xff]
        %v433 = vld [vmem:[#allocation5 + $0x2b0] sm:$0xff]
        %v434 = vld [vmem:[#allocation5 + $0x2b8] sm:$0xff]
        %v435 = vld [vmem:[#allocation5 + $0x2c0] sm:$0xff]
        %v436 = vld [vmem:[#allocation5 + $0x2c8] sm:$0xff]
        %v437 = vld [vmem:[#allocation5 + $0x2d0] sm:$0xff]
        %v438 = vld [vmem:[#allocation5 + $0x2d8] sm:$0xff]
        %v439 = vld [vmem:[#allocation5 + $0x2e0] sm:$0xff]
        %v440 = vld [vmem:[#allocation5 + $0x2e8] sm:$0xff]
        %v441 = vld [vmem:[#allocation5 + $0x2f0] sm:$0xff]
        %v442 = vld [vmem:[#allocation5 + $0x2f8] sm:$0xff]
        %v443 = vld [vmem:[#allocation5 + $0x300] sm:$0xff]
        %v444 = vld [vmem:[#allocation5 + $0x308] sm:$0xff]
        %v445 = vld [vmem:[#allocation5 + $0x310] sm:$0xff]
        %v446 = vld [vmem:[#allocation5 + $0x318] sm:$0xff]
        %v447 = vld [vmem:[#allocation5 + $0x320] sm:$0xff]
        %v448 = vld [vmem:[#allocation5 + $0x328] sm:$0xff]
        %v449 = vld [vmem:[#allocation5 + $0x330] sm:$0xff]
        %v450 = vld [vmem:[#allocation5 + $0x338] sm:$0xff]
        %v451 = vld [vmem:[#allocation5 + $0x340] sm:$0xff]
        %v452 = vld [vmem:[#allocation5 + $0x348] sm:$0xff]
        %v453 = vld [vmem:[#allocation5 + $0x350] sm:$0xff]
        %v454 = vld [vmem:[#allocation5 + $0x358] sm:$0xff]
        %v455 = vld [vmem:[#allocation5 + $0x360] sm:$0xff]
        %v456 = vld [vmem:[#allocation5 + $0x368] sm:$0xff]
        %v457 = vld [vmem:[#allocation5 + $0x370] sm:$0xff]
        %v458 = vld [vmem:[#allocation5 + $0x378] sm:$0xff]
        %v459 = vld [vmem:[#allocation7] sm:$0x3]
        %v461 = vperm.slane %v459, 0
        %v462 = vperm.slane %v459, 1
        %v469 = vunpack.c.l.b16 %v343
        %v470 = vunpack.c.h.b16 %v343
        %v471 = vunpack.c.l.b16 %v344
        %v472 = vunpack.c.h.b16 %v344
        %v473 = vunpack.c.l.b16 %v345
        %v474 = vunpack.c.h.b16 %v345
        %v475 = vunpack.c.l.b16 %v346
        %v476 = vpack.c.b16 %v469, %v469
        %v477 = vpack.c.b16 %v470, %v470
        %v478 = vpack.c.b16 %v471, %v471
        %v479 = vpack.c.b16 %v472, %v472
        %v480 = vpack.c.b16 %v473, %v473
        %v481 = vpack.c.b16 %v474, %v474
        %v482 = vpack.c.b16 %v475, %v475
        %v602 = vunpack.c.l.b16 %v347
        %v603 = vunpack.c.h.b16 %v347
        %v604 = vunpack.c.l.b16 %v348
        %v605 = vunpack.c.h.b16 %v348
        %v606 = vunpack.c.l.b16 %v349
        %v607 = vunpack.c.h.b16 %v349
        %v608 = vunpack.c.l.b16 %v350
        %v609 = vunpack.c.h.b16 %v350
        %v610 = vunpack.c.l.b16 %v351
        %v611 = vunpack.c.h.b16 %v351
        %v612 = vunpack.c.l.b16 %v352
        %v613 = vunpack.c.h.b16 %v352
        %v614 = vunpack.c.l.b16 %v353
        %v615 = vunpack.c.h.b16 %v353
        %v616 = vunpack.c.l.b16 %v354
        %v617 = vunpack.c.h.b16 %v354
        %v618 = vunpack.c.l.b16 %v355
        %v619 = vunpack.c.h.b16 %v355
        %v620 = vunpack.c.l.b16 %v356
        %v621 = vunpack.c.h.b16 %v356
        %v622 = vunpack.c.l.b16 %v357
        %v623 = vunpack.c.h.b16 %v357
        %v624 = vunpack.c.l.b16 %v358
        %v625 = vunpack.c.h.b16 %v358
        %v626 = vunpack.c.l.b16 %v359
        %v627 = vunpack.c.h.b16 %v359
        %v628 = vunpack.c.l.b16 %v360
        %v629 = vunpack.c.h.b16 %v360
        %v630 = vunpack.c.l.b16 %v361
        %v631 = vunpack.c.h.b16 %v361
        %v632 = vunpack.c.l.b16 %v362
        %v633 = vunpack.c.h.b16 %v362
        %v634 = vunpack.c.l.b16 %v363
        %v635 = vunpack.c.h.b16 %v363
        %v636 = vunpack.c.l.b16 %v364
        %v637 = vunpack.c.h.b16 %v364
        %v638 = vunpack.c.l.b16 %v365
        %v639 = vunpack.c.h.b16 %v365
        %v640 = vunpack.c.l.b16 %v366
        %v641 = vunpack.c.h.b16 %v366
        %v642 = vunpack.c.l.b16 %v367
        %v643 = vunpack.c.h.b16 %v367
        %v644 = vunpack.c.l.b16 %v368
        %v645 = vunpack.c.h.b16 %v368
        %v646 = vunpack.c.l.b16 %v369
        %v647 = vunpack.c.h.b16 %v369
        %v648 = vunpack.c.l.b16 %v370
        %v649 = vunpack.c.h.b16 %v370
        %v650 = vunpack.c.l.b16 %v371
        %v651 = vunpack.c.h.b16 %v371
        %v652 = vunpack.c.l.b16 %v372
        %v653 = vunpack.c.h.b16 %v372
        %v654 = vunpack.c.l.b16 %v373
        %v655 = vunpack.c.h.b16 %v373
        %v656 = vunpack.c.l.b16 %v374
        %v657 = vunpack.c.h.b16 %v374
        %v658 = vunpack.c.l.b16 %v375
        %v659 = vunpack.c.h.b16 %v375
        %v660 = vunpack.c.l.b16 %v376
        %v661 = vunpack.c.h.b16 %v376
        %v662 = vunpack.c.l.b16 %v377
        %v663 = vunpack.c.h.b16 %v377
        %v664 = vunpack.c.l.b16 %v378
        %v665 = vunpack.c.h.b16 %v378
        %v666 = vunpack.c.l.b16 %v379
        %v667 = vunpack.c.h.b16 %v379
        %v668 = vunpack.c.l.b16 %v380
        %v669 = vunpack.c.h.b16 %v380
        %v670 = vunpack.c.l.b16 %v381
        %v671 = vunpack.c.h.b16 %v381
        %v672 = vunpack.c.l.b16 %v382
        %v673 = vunpack.c.h.b16 %v382
        %v674 = vunpack.c.l.b16 %v383
        %v675 = vunpack.c.h.b16 %v383
        %v676 = vunpack.c.l.b16 %v384
        %v677 = vunpack.c.h.b16 %v384
        %v678 = vunpack.c.l.b16 %v385
        %v679 = vunpack.c.h.b16 %v385
        %v680 = vunpack.c.l.b16 %v386
        %v681 = vunpack.c.h.b16 %v386
        %v682 = vunpack.c.l.b16 %v387
        %v683 = vunpack.c.h.b16 %v387
        %v684 = vunpack.c.l.b16 %v388
        %v685 = vunpack.c.h.b16 %v388
        %v686 = vunpack.c.l.b16 %v389
        %v687 = vunpack.c.h.b16 %v389
        %v688 = vunpack.c.l.b16 %v390
        %v689 = vunpack.c.h.b16 %v390
        %v690 = vunpack.c.l.b16 %v391
        %v691 = vunpack.c.h.b16 %v391
        %v692 = vunpack.c.l.b16 %v392
        %v693 = vunpack.c.h.b16 %v392
        %v694 = vunpack.c.l.b16 %v393
        %v695 = vunpack.c.h.b16 %v393
        %v696 = vunpack.c.l.b16 %v394
        %v697 = vunpack.c.h.b16 %v394
        %v698 = vunpack.c.l.b16 %v395
        %v699 = vunpack.c.h.b16 %v395
        %v700 = vunpack.c.l.b16 %v396
        %v701 = vunpack.c.h.b16 %v396
        %v702 = vunpack.c.l.b16 %v397
        %v703 = vunpack.c.h.b16 %v397
        %v704 = vunpack.c.l.b16 %v398
        %v705 = vunpack.c.h.b16 %v398
        %v706 = vunpack.c.l.b16 %v399
        %v707 = vunpack.c.h.b16 %v399
        %v708 = vunpack.c.l.b16 %v400
        %v709 = vunpack.c.h.b16 %v400
        %v710 = vunpack.c.l.b16 %v401
        %v711 = vunpack.c.h.b16 %v401
        %v712 = vunpack.c.l.b16 %v402
        %v713 = vunpack.c.h.b16 %v402
        %v714 = vunpack.c.l.b16 %v403
        %v715 = vunpack.c.h.b16 %v403
        %v716 = vunpack.c.l.b16 %v404
        %v717 = vunpack.c.h.b16 %v404
        %v718 = vunpack.c.l.b16 %v405
        %v719 = vunpack.c.h.b16 %v405
        %v720 = vunpack.c.l.b16 %v406
        %v721 = vunpack.c.h.b16 %v406
        %v722 = vunpack.c.l.b16 %v407
        %v723 = vunpack.c.h.b16 %v407
        %v724 = vunpack.c.l.b16 %v408
        %v725 = vunpack.c.h.b16 %v408
        %v726 = vunpack.c.l.b16 %v409
        %v727 = vunpack.c.h.b16 %v409
        %v728 = vunpack.c.l.b16 %v410
        %v729 = vunpack.c.h.b16 %v410
        %v730 = vunpack.c.l.b16 %v411
        %v731 = vunpack.c.h.b16 %v411
        %v732 = vunpack.c.l.b16 %v412
        %v733 = vunpack.c.h.b16 %v412
        %v734 = vunpack.c.l.b16 %v413
        %v735 = vunpack.c.h.b16 %v413
        %v736 = vunpack.c.l.b16 %v414
        %v737 = vunpack.c.h.b16 %v414
        %v738 = vunpack.c.l.b16 %v415
        %v739 = vunpack.c.h.b16 %v415
        %v740 = vunpack.c.l.b16 %v416
        %v741 = vunpack.c.h.b16 %v416
        %v742 = vunpack.c.l.b16 %v417
        %v743 = vunpack.c.h.b16 %v417
        %v744 = vunpack.c.l.b16 %v418
        %v745 = vunpack.c.h.b16 %v418
        %v746 = vunpack.c.l.b16 %v419
        %v747 = vunpack.c.h.b16 %v419
        %v748 = vunpack.c.l.b16 %v420
        %v749 = vunpack.c.h.b16 %v420
        %v750 = vunpack.c.l.b16 %v421
        %v751 = vunpack.c.h.b16 %v421
        %v752 = vunpack.c.l.b16 %v422
        %v753 = vunpack.c.h.b16 %v422
        %v754 = vunpack.c.l.b16 %v423
        %v755 = vunpack.c.h.b16 %v423
        %v756 = vunpack.c.l.b16 %v424
        %v757 = vunpack.c.h.b16 %v424
        %v758 = vunpack.c.l.b16 %v425
        %v759 = vunpack.c.h.b16 %v425
        %v760 = vunpack.c.l.b16 %v426
        %v761 = vunpack.c.h.b16 %v426
        %v762 = vunpack.c.l.b16 %v427
        %v763 = vunpack.c.h.b16 %v427
        %v764 = vunpack.c.l.b16 %v428
        %v765 = vunpack.c.h.b16 %v428
        %v766 = vunpack.c.l.b16 %v429
        %v767 = vunpack.c.h.b16 %v429
        %v768 = vunpack.c.l.b16 %v430
        %v769 = vunpack.c.h.b16 %v430
        %v770 = vunpack.c.l.b16 %v431
        %v771 = vunpack.c.h.b16 %v431
        %v772 = vunpack.c.l.b16 %v432
        %v773 = vunpack.c.h.b16 %v432
        %v774 = vunpack.c.l.b16 %v433
        %v775 = vunpack.c.h.b16 %v433
        %v776 = vunpack.c.l.b16 %v434
        %v777 = vunpack.c.h.b16 %v434
        %v778 = vunpack.c.l.b16 %v435
        %v779 = vunpack.c.h.b16 %v435
        %v780 = vunpack.c.l.b16 %v436
        %v781 = vunpack.c.h.b16 %v436
        %v782 = vunpack.c.l.b16 %v437
        %v783 = vunpack.c.h.b16 %v437
        %v784 = vunpack.c.l.b16 %v438
        %v785 = vunpack.c.h.b16 %v438
        %v786 = vunpack.c.l.b16 %v439
        %v787 = vunpack.c.h.b16 %v439
        %v788 = vunpack.c.l.b16 %v440
        %v789 = vunpack.c.h.b16 %v440
        %v790 = vunpack.c.l.b16 %v441
        %v791 = vunpack.c.h.b16 %v441
        %v792 = vunpack.c.l.b16 %v442
        %v793 = vunpack.c.h.b16 %v442
        %v794 = vunpack.c.l.b16 %v443
        %v795 = vunpack.c.h.b16 %v443
        %v796 = vunpack.c.l.b16 %v444
        %v797 = vunpack.c.h.b16 %v444
        %v798 = vunpack.c.l.b16 %v445
        %v799 = vunpack.c.h.b16 %v445
        %v800 = vunpack.c.l.b16 %v446
        %v801 = vunpack.c.h.b16 %v446
        %v802 = vunpack.c.l.b16 %v447
        %v803 = vunpack.c.h.b16 %v447
        %v804 = vunpack.c.l.b16 %v448
        %v805 = vunpack.c.h.b16 %v448
        %v806 = vunpack.c.l.b16 %v449
        %v807 = vunpack.c.h.b16 %v449
        %v808 = vunpack.c.l.b16 %v450
        %v809 = vunpack.c.h.b16 %v450
        %v810 = vunpack.c.l.b16 %v451
        %v811 = vunpack.c.h.b16 %v451
        %v812 = vunpack.c.l.b16 %v452
        %v813 = vunpack.c.h.b16 %v452
        %v814 = vunpack.c.l.b16 %v453
        %v815 = vunpack.c.h.b16 %v453
        %v816 = vunpack.c.l.b16 %v454
        %v817 = vunpack.c.h.b16 %v454
        %v818 = vunpack.c.l.b16 %v455
        %v819 = vunpack.c.h.b16 %v455
        %v820 = vunpack.c.l.b16 %v456
        %v821 = vunpack.c.h.b16 %v456
        %v822 = vunpack.c.l.b16 %v457
        %v823 = vunpack.c.h.b16 %v457
        %v824 = vunpack.c.l.b16 %v458
        %v825 = vunpack.c.h.b16 %v458
        %v826 = vpack.c.b16 %v604, %v602
        %v827 = vpack.c.b16 %v605, %v603
        %v828 = vpack.c.b16 %v608, %v606
        %v829 = vpack.c.b16 %v609, %v607
        %v830 = vpack.c.b16 %v612, %v610
        %v831 = vpack.c.b16 %v613, %v611
        %v832 = vpack.c.b16 %v616, %v614
        %v833 = vpack.c.b16 %v617, %v615
        %v834 = vpack.c.b16 %v620, %v618
        %v835 = vpack.c.b16 %v621, %v619
        %v836 = vpack.c.b16 %v624, %v622
        %v837 = vpack.c.b16 %v625, %v623
        %v838 = vpack.c.b16 %v628, %v626
        %v839 = vpack.c.b16 %v629, %v627
        %v840 = vpack.c.b16 %v632, %v630
        %v841 = vpack.c.b16 %v633, %v631
        %v842 = vpack.c.b16 %v636, %v634
        %v843 = vpack.c.b16 %v637, %v635
        %v844 = vpack.c.b16 %v640, %v638
        %v845 = vpack.c.b16 %v641, %v639
        %v846 = vpack.c.b16 %v644, %v642
        %v847 = vpack.c.b16 %v645, %v643
        %v848 = vpack.c.b16 %v648, %v646
        %v849 = vpack.c.b16 %v649, %v647
        %v850 = vpack.c.b16 %v652, %v650
        %v851 = vpack.c.b16 %v653, %v651
        %v852 = vpack.c.b16 %v656, %v654
        %v853 = vpack.c.b16 %v657, %v655
        %v854 = vpack.c.b16 %v660, %v658
        %v855 = vpack.c.b16 %v661, %v659
        %v856 = vpack.c.b16 %v664, %v662
        %v857 = vpack.c.b16 %v665, %v663
        %v858 = vpack.c.b16 %v668, %v666
        %v859 = vpack.c.b16 %v669, %v667
        %v860 = vpack.c.b16 %v672, %v670
        %v861 = vpack.c.b16 %v673, %v671
        %v862 = vpack.c.b16 %v676, %v674
        %v863 = vpack.c.b16 %v677, %v675
        %v864 = vpack.c.b16 %v680, %v678
        %v865 = vpack.c.b16 %v681, %v679
        %v866 = vpack.c.b16 %v684, %v682
        %v867 = vpack.c.b16 %v685, %v683
        %v868 = vpack.c.b16 %v688, %v686
        %v869 = vpack.c.b16 %v689, %v687
        %v870 = vpack.c.b16 %v692, %v690
        %v871 = vpack.c.b16 %v693, %v691
        %v872 = vpack.c.b16 %v696, %v694
        %v873 = vpack.c.b16 %v697, %v695
        %v874 = vpack.c.b16 %v700, %v698
        %v875 = vpack.c.b16 %v701, %v699
        %v876 = vpack.c.b16 %v704, %v702
        %v877 = vpack.c.b16 %v705, %v703
        %v878 = vpack.c.b16 %v708, %v706
        %v879 = vpack.c.b16 %v709, %v707
        %v880 = vpack.c.b16 %v712, %v710
        %v881 = vpack.c.b16 %v713, %v711
        %v882 = vpack.c.b16 %v716, %v714
        %v883 = vpack.c.b16 %v717, %v715
        %v884 = vpack.c.b16 %v720, %v718
        %v885 = vpack.c.b16 %v721, %v719
        %v886 = vpack.c.b16 %v724, %v722
        %v887 = vpack.c.b16 %v725, %v723
        %v888 = vpack.c.b16 %v728, %v726
        %v889 = vpack.c.b16 %v729, %v727
        %v890 = vpack.c.b16 %v732, %v730
        %v891 = vpack.c.b16 %v733, %v731
        %v892 = vpack.c.b16 %v736, %v734
        %v893 = vpack.c.b16 %v737, %v735
        %v894 = vpack.c.b16 %v740, %v738
        %v895 = vpack.c.b16 %v741, %v739
        %v896 = vpack.c.b16 %v744, %v742
        %v897 = vpack.c.b16 %v745, %v743
        %v898 = vpack.c.b16 %v748, %v746
        %v899 = vpack.c.b16 %v749, %v747
        %v900 = vpack.c.b16 %v752, %v750
        %v901 = vpack.c.b16 %v753, %v751
        %v902 = vpack.c.b16 %v756, %v754
        %v903 = vpack.c.b16 %v757, %v755
        %v904 = vpack.c.b16 %v760, %v758
        %v905 = vpack.c.b16 %v761, %v759
        %v906 = vpack.c.b16 %v764, %v762
        %v907 = vpack.c.b16 %v765, %v763
        %v908 = vpack.c.b16 %v768, %v766
        %v909 = vpack.c.b16 %v769, %v767
        %v910 = vpack.c.b16 %v772, %v770
        %v911 = vpack.c.b16 %v773, %v771
        %v912 = vpack.c.b16 %v776, %v774
        %v913 = vpack.c.b16 %v777, %v775
        %v914 = vpack.c.b16 %v780, %v778
        %v915 = vpack.c.b16 %v781, %v779
        %v916 = vpack.c.b16 %v784, %v782
        %v917 = vpack.c.b16 %v785, %v783
        %v918 = vpack.c.b16 %v788, %v786
        %v919 = vpack.c.b16 %v789, %v787
        %v920 = vpack.c.b16 %v792, %v790
        %v921 = vpack.c.b16 %v793, %v791
        %v922 = vpack.c.b16 %v796, %v794
        %v923 = vpack.c.b16 %v797, %v795
        %v924 = vpack.c.b16 %v800, %v798
        %v925 = vpack.c.b16 %v801, %v799
        %v926 = vpack.c.b16 %v804, %v802
        %v927 = vpack.c.b16 %v805, %v803
        %v928 = vpack.c.b16 %v808, %v806
        %v929 = vpack.c.b16 %v809, %v807
        %v930 = vpack.c.b16 %v812, %v810
        %v931 = vpack.c.b16 %v813, %v811
        %v932 = vpack.c.b16 %v816, %v814
        %v933 = vpack.c.b16 %v817, %v815
        %v934 = vpack.c.b16 %v820, %v818
        %v935 = vpack.c.b16 %v821, %v819
        %v936 = vpack.c.b16 %v824, %v822
        %v937 = vpack.c.b16 %v825, %v823
        %1050 = vmatpush.bf16.msra.mxu0 %v840
        %1051 = vmatpush.bf16.msra.mxu0 %v838
        %1052 = vmatpush.bf16.msra.mxu0 %v836
        %1053 = vmatpush.bf16.msra.mxu0 %v834
        %1054 = vmatpush.bf16.msra.mxu0 %v832
        %1055 = vmatpush.bf16.msra.mxu0 %v830
        %1056 = vmatpush.bf16.msra.mxu0 %v828
        %1057 = vmatpush.bf16.msra.mxu0 %v826
        %1058 = vmatmul.bf16.gmra.mxu0 %v476
        %v1059 = vpop.f32.mrf.mxu0
        %v1060 = vadd.f32 %v461, %v1059
        %v1061 = vpop.f32.mrf.mxu0
        %1062 = vdwg.mxu0
        %1063 = vmatpush.bf16.msra.mxu0 %v856
        %1064 = vmatpush.bf16.msra.mxu0 %v854
        %1065 = vmatpush.bf16.msra.mxu0 %v852
        %1066 = vmatpush.bf16.msra.mxu0 %v850
        %1067 = vmatpush.bf16.msra.mxu0 %v848
        %1068 = vmatpush.bf16.msra.mxu0 %v846
        %1069 = vmatpush.bf16.msra.mxu0 %v844
        %1070 = vmatpush.bf16.msra.mxu0 %v842
        %1071 = vmatmul.bf16.gmra.mxu0 %v477
        %v1072 = vpop.f32.mrf.mxu0
        %v1073 = vadd.f32 %v1060, %v1072
        %v1074 = vpop.f32.mrf.mxu0
        %1075 = vdwg.mxu0
        %1076 = vmatpush.bf16.msra.mxu0 %v872
        %1077 = vmatpush.bf16.msra.mxu0 %v870
        %1078 = vmatpush.bf16.msra.mxu0 %v868
        %1079 = vmatpush.bf16.msra.mxu0 %v866
        %1080 = vmatpush.bf16.msra.mxu0 %v864
        %1081 = vmatpush.bf16.msra.mxu0 %v862
        %1082 = vmatpush.bf16.msra.mxu0 %v860
        %1083 = vmatpush.bf16.msra.mxu0 %v858
        %1084 = vmatmul.bf16.gmra.mxu0 %v478
        %v1085 = vpop.f32.mrf.mxu0
        %v1086 = vadd.f32 %v1073, %v1085
        %v1087 = vpop.f32.mrf.mxu0
        %1088 = vdwg.mxu0
        %1089 = vmatpush.bf16.msra.mxu0 %v888
        %1090 = vmatpush.bf16.msra.mxu0 %v886
        %1091 = vmatpush.bf16.msra.mxu0 %v884
        %1092 = vmatpush.bf16.msra.mxu0 %v882
        %1093 = vmatpush.bf16.msra.mxu0 %v880
        %1094 = vmatpush.bf16.msra.mxu0 %v878
        %1095 = vmatpush.bf16.msra.mxu0 %v876
        %1096 = vmatpush.bf16.msra.mxu0 %v874
        %1097 = vmatmul.bf16.gmra.mxu0 %v479
        %v1098 = vpop.f32.mrf.mxu0
        %v1099 = vadd.f32 %v1086, %v1098
        %v1100 = vpop.f32.mrf.mxu0
        %1101 = vdwg.mxu0
        %1102 = vmatpush.bf16.msra.mxu0 %v904
        %1103 = vmatpush.bf16.msra.mxu0 %v902
        %1104 = vmatpush.bf16.msra.mxu0 %v900
        %1105 = vmatpush.bf16.msra.mxu0 %v898
        %1106 = vmatpush.bf16.msra.mxu0 %v896
        %1107 = vmatpush.bf16.msra.mxu0 %v894
        %1108 = vmatpush.bf16.msra.mxu0 %v892
        %1109 = vmatpush.bf16.msra.mxu0 %v890
        %1110 = vmatmul.bf16.gmra.mxu0 %v480
        %v1111 = vpop.f32.mrf.mxu0
        %v1112 = vadd.f32 %v1099, %v1111
        %v1113 = vpop.f32.mrf.mxu0
        %1114 = vdwg.mxu0
        %1115 = vmatpush.bf16.msra.mxu0 %v920
        %1116 = vmatpush.bf16.msra.mxu0 %v918
        %1117 = vmatpush.bf16.msra.mxu0 %v916
        %1118 = vmatpush.bf16.msra.mxu0 %v914
        %1119 = vmatpush.bf16.msra.mxu0 %v912
        %1120 = vmatpush.bf16.msra.mxu0 %v910
        %1121 = vmatpush.bf16.msra.mxu0 %v908
        %1122 = vmatpush.bf16.msra.mxu0 %v906
        %1123 = vmatmul.bf16.gmra.mxu0 %v481
        %v1124 = vpop.f32.mrf.mxu0
        %v1125 = vadd.f32 %v1112, %v1124
        %v1126 = vpop.f32.mrf.mxu0
        %1127 = vdwg.mxu0
        %1128 = vmatpush.bf16.msra.mxu0 %v936
        %1129 = vmatpush.bf16.msra.mxu0 %v934
        %1130 = vmatpush.bf16.msra.mxu0 %v932
        %1131 = vmatpush.bf16.msra.mxu0 %v930
        %1132 = vmatpush.bf16.msra.mxu0 %v928
        %1133 = vmatpush.bf16.msra.mxu0 %v926
        %1134 = vmatpush.bf16.msra.mxu0 %v924
        %1135 = vmatpush.bf16.msra.mxu0 %v922
        %1136 = vmatmul.bf16.gmra.mxu0 %v482
        %v1137 = vpop.f32.mrf.mxu0
        %v1138 = vadd.f32 %v1125, %v1137
        %v1139 = vpop.f32.mrf.mxu0
        %1140 = vdwg.mxu0
        %1141 = vmatpush.bf16.msra.mxu0 %v841
        %1142 = vmatpush.bf16.msra.mxu0 %v839
        %1143 = vmatpush.bf16.msra.mxu0 %v837
        %1144 = vmatpush.bf16.msra.mxu0 %v835
        %1145 = vmatpush.bf16.msra.mxu0 %v833
        %1146 = vmatpush.bf16.msra.mxu0 %v831
        %1147 = vmatpush.bf16.msra.mxu0 %v829
        %1148 = vmatpush.bf16.msra.mxu0 %v827
        %1149 = vmatmul.bf16.gmra.mxu0 %v476
        %v1150 = vpop.f32.mrf.mxu0
        %v1151 = vadd.f32 %v462, %v1150
        %v1152 = vpop.f32.mrf.mxu0
        %1153 = vdwg.mxu0
        %1154 = vmatpush.bf16.msra.mxu0 %v857
        %1155 = vmatpush.bf16.msra.mxu0 %v855
        %1156 = vmatpush.bf16.msra.mxu0 %v853
        %1157 = vmatpush.bf16.msra.mxu0 %v851
        %1158 = vmatpush.bf16.msra.mxu0 %v849
        %1159 = vmatpush.bf16.msra.mxu0 %v847
        %1160 = vmatpush.bf16.msra.mxu0 %v845
        %1161 = vmatpush.bf16.msra.mxu0 %v843
        %1162 = vmatmul.bf16.gmra.mxu0 %v477
        %v1163 = vpop.f32.mrf.mxu0
        %v1164 = vadd.f32 %v1151, %v1163
        %v1165 = vpop.f32.mrf.mxu0
        %1166 = vdwg.mxu0
        %1167 = vmatpush.bf16.msra.mxu0 %v873
        %1168 = vmatpush.bf16.msra.mxu0 %v871
        %1169 = vmatpush.bf16.msra.mxu0 %v869
        %1170 = vmatpush.bf16.msra.mxu0 %v867
        %1171 = vmatpush.bf16.msra.mxu0 %v865
        %1172 = vmatpush.bf16.msra.mxu0 %v863
        %1173 = vmatpush.bf16.msra.mxu0 %v861
        %1174 = vmatpush.bf16.msra.mxu0 %v859
        %1175 = vmatmul.bf16.gmra.mxu0 %v478
        %v1176 = vpop.f32.mrf.mxu0
        %v1177 = vadd.f32 %v1164, %v1176
        %v1178 = vpop.f32.mrf.mxu0
        %1179 = vdwg.mxu0
        %1180 = vmatpush.bf16.msra.mxu0 %v889
        %1181 = vmatpush.bf16.msra.mxu0 %v887
        %1182 = vmatpush.bf16.msra.mxu0 %v885
        %1183 = vmatpush.bf16.msra.mxu0 %v883
        %1184 = vmatpush.bf16.msra.mxu0 %v881
        %1185 = vmatpush.bf16.msra.mxu0 %v879
        %1186 = vmatpush.bf16.msra.mxu0 %v877
        %1187 = vmatpush.bf16.msra.mxu0 %v875
        %1188 = vmatmul.bf16.gmra.mxu0 %v479
        %v1189 = vpop.f32.mrf.mxu0
        %v1190 = vadd.f32 %v1177, %v1189
        %v1191 = vpop.f32.mrf.mxu0
        %1192 = vdwg.mxu0
        %1193 = vmatpush.bf16.msra.mxu0 %v905
        %1194 = vmatpush.bf16.msra.mxu0 %v903
        %1195 = vmatpush.bf16.msra.mxu0 %v901
        %1196 = vmatpush.bf16.msra.mxu0 %v899
        %1197 = vmatpush.bf16.msra.mxu0 %v897
        %1198 = vmatpush.bf16.msra.mxu0 %v895
        %1199 = vmatpush.bf16.msra.mxu0 %v893
        %1200 = vmatpush.bf16.msra.mxu0 %v891
        %1201 = vmatmul.bf16.gmra.mxu0 %v480
        %v1202 = vpop.f32.mrf.mxu0
        %v1203 = vadd.f32 %v1190, %v1202
        %v1204 = vpop.f32.mrf.mxu0
        %1205 = vdwg.mxu0
        %1206 = vmatpush.bf16.msra.mxu0 %v921
        %1207 = vmatpush.bf16.msra.mxu0 %v919
        %1208 = vmatpush.bf16.msra.mxu0 %v917
        %1209 = vmatpush.bf16.msra.mxu0 %v915
        %1210 = vmatpush.bf16.msra.mxu0 %v913
        %1211 = vmatpush.bf16.msra.mxu0 %v911
        %1212 = vmatpush.bf16.msra.mxu0 %v909
        %1213 = vmatpush.bf16.msra.mxu0 %v907
        %1214 = vmatmul.bf16.gmra.mxu0 %v481
        %v1215 = vpop.f32.mrf.mxu0
        %v1216 = vadd.f32 %v1203, %v1215
        %v1217 = vpop.f32.mrf.mxu0
        %1218 = vdwg.mxu0
        %1219 = vmatpush.bf16.msra.mxu0 %v937
        %1220 = vmatpush.bf16.msra.mxu0 %v935
        %1221 = vmatpush.bf16.msra.mxu0 %v933
        %1222 = vmatpush.bf16.msra.mxu0 %v931
        %1223 = vmatpush.bf16.msra.mxu0 %v929
        %1224 = vmatpush.bf16.msra.mxu0 %v927
        %1225 = vmatpush.bf16.msra.mxu0 %v925
        %1226 = vmatpush.bf16.msra.mxu0 %v923
        %1227 = vmatmul.bf16.gmra.mxu0 %v482
        %v1228 = vpop.f32.mrf.mxu0
        %v1229 = vadd.f32 %v1216, %v1228
        %v1230 = vpop.f32.mrf.mxu0
        %1231 = vdwg.mxu0
        %v1232 = vlaneseq
        %v1233 = vand.u32 %v1232, 127
        %v1234 = vadd.s32 %v1233, 128
        loop: start=0, step=1, limit=60
        $region61: #{tpu_custom_call.1} parent=39 // loop_pre_header
          _
        $region62: #{tpu_custom_call.1} parent=39 // loop_header
          %s1236 = sphi 0, %s1240
          %p1237 = scmp.ge.s32.totalorder %s1236, 60
          %v1241 = vphi %v1138, %v1268
          %v1242 = vphi %v1229, %v1269
        $region63: #{tpu_custom_call.1} parent=39 // loop_header_branch
          %1239 = sbr.rel (%p1237) target = $region67
        $region64: #{tpu_custom_call.1} parent=39 // loop_body
          %v1243 = vmax.f32 %v1241, %v1242
          %1244 = vmax.xlane.f32.xlu0 %v1243
          %v1245 = vpop.xlane.xlu0 %1244
          %vm1246 = vcmp.eq.f32.partialorder %v1241, %v1245
          %vm1247 = vcmp.eq.f32.partialorder %v1242, %v1245
          %v1248 = vsel %vm1246, %v1233, 256
          %v1249 = vsel %vm1247, %v1234, 256
          %vm1250 = vcmp.lt.s32.totalorder %v1248, %v1249
          %v1251 = vsel %vm1250, %v1248, %v1249
          %v1252 = vand.u32 %v1251, 65535
          %v1253 = vshra.s32 %v1251, 16
          %v1254 = vcvt.s32.f32 %v1252
          %v1255 = vcvt.s32.f32 %v1253
          %1256 = vmin.xlane.f32.xlu0 %v1255
          %v1257 = vpop.xlane.xlu0 %1256
          %vm1258 = vcmp.eq.f32.partialorder %v1255, %v1257
          %v1259 = vsel %vm1258, %v1254, inf
          %1260 = vmin.xlane.f32.xlu0 %v1259
          %v1261 = vpop.xlane.xlu0 %1260
          %v1262 = vcvt.f32.s32 %v1261
          %v1263 = vcvt.f32.s32 %v1257
          %v1264 = vshll.u32 %v1263, 16
          %v1265 = vadd.s32 %v1264, %v1262
          %vm1266 = vcmp.eq.s32.totalorder %v1233, %v1265
          %vm1267 = vcmp.eq.s32.totalorder %v1234, %v1265
          %v1268 = vsel %vm1266, -inf, %v1241
          %v1269 = vsel %vm1267, -inf, %v1242
        $region65: #{tpu_custom_call.1} parent=39 // loop_footer
          %s1240 = sadd.s32 1, %s1236
        $region66: #{tpu_custom_call.1} parent=39 // loop_footer_branch
          %1235 = sbr.rel target = $region62
        $region67: #{tpu_custom_call.1} parent=39 // loop_exit
          _
        %vm1270 = vcmp.eq.f32.partialorder %v1241, -inf
        %vm1271 = vcmp.eq.f32.partialorder %v1242, -inf
        %v1272 = vsel %vm1270, %v1138, 0.0
        %v1273 = vsel %vm1271, %v1229, 0.0
        %v1274 = vpack.c.bf16 %v1272, %v1272
        %v1275 = vpack.c.bf16 %v1273, %v1273
        %v1276 = vld [vmem:[#allocation8] sm:$0xff]
        %v1277 = vld [vmem:[#allocation8 + $0x8] sm:$0xff]
        %v1278 = vld [vmem:[#allocation8 + $0x10] sm:$0xff]
        %v1279 = vld [vmem:[#allocation8 + $0x18] sm:$0xf]
        %v1280 = vld [vmem:[#allocation8 + $0x1c] sm:$0xff]
        %v1281 = vld [vmem:[#allocation8 + $0x24] sm:$0xff]
        %v1282 = vld [vmem:[#allocation8 + $0x2c] sm:$0xff]
        %v1283 = vld [vmem:[#allocation8 + $0x34] sm:$0xf]
        %v1284 = vld [vmem:[#allocation8 + $0x38] sm:$0xff]
        %v1285 = vld [vmem:[#allocation8 + $0x40] sm:$0xff]
        %v1286 = vld [vmem:[#allocation8 + $0x48] sm:$0xff]
        %v1287 = vld [vmem:[#allocation8 + $0x50] sm:$0xf]
        %v1288 = vld [vmem:[#allocation8 + $0x54] sm:$0xff]
        %v1289 = vld [vmem:[#allocation8 + $0x5c] sm:$0xff]
        %v1290 = vld [vmem:[#allocation8 + $0x64] sm:$0xff]
        %v1291 = vld [vmem:[#allocation8 + $0x6c] sm:$0xf]
        %v1292 = vld [vmem:[#allocation8 + $0x70] sm:$0xff]
        %v1293 = vld [vmem:[#allocation8 + $0x78] sm:$0xff]
        %v1294 = vld [vmem:[#allocation8 + $0x80] sm:$0xff]
        %v1295 = vld [vmem:[#allocation8 + $0x88] sm:$0xf]
        %v1296 = vld [vmem:[#allocation8 + $0x8c] sm:$0xff]
        %v1297 = vld [vmem:[#allocation8 + $0x94] sm:$0xff]
        %v1298 = vld [vmem:[#allocation8 + $0x9c] sm:$0xff]
        %v1299 = vld [vmem:[#allocation8 + $0xa4] sm:$0xf]
        %v1300 = vld [vmem:[#allocation8 + $0xa8] sm:$0xff]
        %v1301 = vld [vmem:[#allocation8 + $0xb0] sm:$0xff]
        %v1302 = vld [vmem:[#allocation8 + $0xb8] sm:$0xff]
        %v1303 = vld [vmem:[#allocation8 + $0xc0] sm:$0xf]
        %v1304 = vld [vmem:[#allocation8 + $0xc4] sm:$0xff]
        %v1305 = vld [vmem:[#allocation8 + $0xcc] sm:$0xff]
        %v1306 = vld [vmem:[#allocation8 + $0xd4] sm:$0xff]
        %v1307 = vld [vmem:[#allocation8 + $0xdc] sm:$0xf]
        %v1308 = vld [vmem:[#allocation8 + $0xe0] sm:$0xff]
        %v1309 = vld [vmem:[#allocation8 + $0xe8] sm:$0xff]
        %v1310 = vld [vmem:[#allocation8 + $0xf0] sm:$0xff]
        %v1311 = vld [vmem:[#allocation8 + $0xf8] sm:$0xf]
        %v1312 = vld [vmem:[#allocation8 + $0xfc] sm:$0xff]
        %v1313 = vld [vmem:[#allocation8 + $0x104] sm:$0xff]
        %v1314 = vld [vmem:[#allocation8 + $0x10c] sm:$0xff]
        %v1315 = vld [vmem:[#allocation8 + $0x114] sm:$0xf]
        %v1316 = vld [vmem:[#allocation8 + $0x118] sm:$0xff]
        %v1317 = vld [vmem:[#allocation8 + $0x120] sm:$0xff]
        %v1318 = vld [vmem:[#allocation8 + $0x128] sm:$0xff]
        %v1319 = vld [vmem:[#allocation8 + $0x130] sm:$0xf]
        %v1320 = vld [vmem:[#allocation8 + $0x134] sm:$0xff]
        %v1321 = vld [vmem:[#allocation8 + $0x13c] sm:$0xff]
        %v1322 = vld [vmem:[#allocation8 + $0x144] sm:$0xff]
        %v1323 = vld [vmem:[#allocation8 + $0x14c] sm:$0xf]
        %v1324 = vld [vmem:[#allocation8 + $0x150] sm:$0xff]
        %v1325 = vld [vmem:[#allocation8 + $0x158] sm:$0xff]
        %v1326 = vld [vmem:[#allocation8 + $0x160] sm:$0xff]
        %v1327 = vld [vmem:[#allocation8 + $0x168] sm:$0xf]
        %v1328 = vld [vmem:[#allocation8 + $0x16c] sm:$0xff]
        %v1329 = vld [vmem:[#allocation8 + $0x174] sm:$0xff]
        %v1330 = vld [vmem:[#allocation8 + $0x17c] sm:$0xff]
        %v1331 = vld [vmem:[#allocation8 + $0x184] sm:$0xf]
        %v1332 = vld [vmem:[#allocation8 + $0x188] sm:$0xff]
        %v1333 = vld [vmem:[#allocation8 + $0x190] sm:$0xff]
        %v1334 = vld [vmem:[#allocation8 + $0x198] sm:$0xff]
        %v1335 = vld [vmem:[#allocation8 + $0x1a0] sm:$0xf]
        %v1336 = vld [vmem:[#allocation8 + $0x1a4] sm:$0xff]
        %v1337 = vld [vmem:[#allocation8 + $0x1ac] sm:$0xff]
        %v1338 = vld [vmem:[#allocation8 + $0x1b4] sm:$0xff]
        %v1339 = vld [vmem:[#allocation8 + $0x1bc] sm:$0xf]
        %v1340 = vld [vmem:[#allocation8 + $0x1c0] sm:$0xff]
        %v1341 = vld [vmem:[#allocation8 + $0x1c8] sm:$0xff]
        %v1342 = vld [vmem:[#allocation8 + $0x1d0] sm:$0xff]
        %v1343 = vld [vmem:[#allocation8 + $0x1d8] sm:$0xf]
        %v1344 = vld [vmem:[#allocation8 + $0x1dc] sm:$0xff]
        %v1345 = vld [vmem:[#allocation8 + $0x1e4] sm:$0xff]
        %v1346 = vld [vmem:[#allocation8 + $0x1ec] sm:$0xff]
        %v1347 = vld [vmem:[#allocation8 + $0x1f4] sm:$0xf]
        %v1348 = vld [vmem:[#allocation8 + $0x1f8] sm:$0xff]
        %v1349 = vld [vmem:[#allocation8 + $0x200] sm:$0xff]
        %v1350 = vld [vmem:[#allocation8 + $0x208] sm:$0xff]
        %v1351 = vld [vmem:[#allocation8 + $0x210] sm:$0xf]
        %v1352 = vld [vmem:[#allocation8 + $0x214] sm:$0xff]
        %v1353 = vld [vmem:[#allocation8 + $0x21c] sm:$0xff]
        %v1354 = vld [vmem:[#allocation8 + $0x224] sm:$0xff]
        %v1355 = vld [vmem:[#allocation8 + $0x22c] sm:$0xf]
        %v1356 = vld [vmem:[#allocation8 + $0x230] sm:$0xff]
        %v1357 = vld [vmem:[#allocation8 + $0x238] sm:$0xff]
        %v1358 = vld [vmem:[#allocation8 + $0x240] sm:$0xff]
        %v1359 = vld [vmem:[#allocation8 + $0x248] sm:$0xf]
        %v1360 = vld [vmem:[#allocation8 + $0x24c] sm:$0xff]
        %v1361 = vld [vmem:[#allocation8 + $0x254] sm:$0xff]
        %v1362 = vld [vmem:[#allocation8 + $0x25c] sm:$0xff]
        %v1363 = vld [vmem:[#allocation8 + $0x264] sm:$0xf]
        %v1364 = vld [vmem:[#allocation8 + $0x268] sm:$0xff]
        %v1365 = vld [vmem:[#allocation8 + $0x270] sm:$0xff]
        %v1366 = vld [vmem:[#allocation8 + $0x278] sm:$0xff]
        %v1367 = vld [vmem:[#allocation8 + $0x280] sm:$0xf]
        %v1368 = vld [vmem:[#allocation8 + $0x284] sm:$0xff]
        %v1369 = vld [vmem:[#allocation8 + $0x28c] sm:$0xff]
        %v1370 = vld [vmem:[#allocation8 + $0x294] sm:$0xff]
        %v1371 = vld [vmem:[#allocation8 + $0x29c] sm:$0xf]
        %v1372 = vld [vmem:[#allocation8 + $0x2a0] sm:$0xff]
        %v1373 = vld [vmem:[#allocation8 + $0x2a8] sm:$0xff]
        %v1374 = vld [vmem:[#allocation8 + $0x2b0] sm:$0xff]
        %v1375 = vld [vmem:[#allocation8 + $0x2b8] sm:$0xf]
        %v1376 = vld [vmem:[#allocation8 + $0x2bc] sm:$0xff]
        %v1377 = vld [vmem:[#allocation8 + $0x2c4] sm:$0xff]
        %v1378 = vld [vmem:[#allocation8 + $0x2cc] sm:$0xff]
        %v1379 = vld [vmem:[#allocation8 + $0x2d4] sm:$0xf]
        %v1380 = vld [vmem:[#allocation8 + $0x2d8] sm:$0xff]
        %v1381 = vld [vmem:[#allocation8 + $0x2e0] sm:$0xff]
        %v1382 = vld [vmem:[#allocation8 + $0x2e8] sm:$0xff]
        %v1383 = vld [vmem:[#allocation8 + $0x2f0] sm:$0xf]
        %v1384 = vld [vmem:[#allocation8 + $0x2f4] sm:$0xff]
        %v1385 = vld [vmem:[#allocation8 + $0x2fc] sm:$0xff]
        %v1386 = vld [vmem:[#allocation8 + $0x304] sm:$0xff]
        %v1387 = vld [vmem:[#allocation8 + $0x30c] sm:$0xf]
        %v1388 = vld [vmem:[#allocation8 + $0x310] sm:$0xff]
        %v1389 = vld [vmem:[#allocation8 + $0x318] sm:$0xff]
        %v1390 = vld [vmem:[#allocation8 + $0x320] sm:$0xff]
        %v1391 = vld [vmem:[#allocation8 + $0x328] sm:$0xf]
        %v1392 = vld [vmem:[#allocation8 + $0x32c] sm:$0xff]
        %v1393 = vld [vmem:[#allocation8 + $0x334] sm:$0xff]
        %v1394 = vld [vmem:[#allocation8 + $0x33c] sm:$0xff]
        %v1395 = vld [vmem:[#allocation8 + $0x344] sm:$0xf]
        %v1396 = vld [vmem:[#allocation8 + $0x348] sm:$0xff]
        %v1397 = vld [vmem:[#allocation8 + $0x350] sm:$0xff]
        %v1398 = vld [vmem:[#allocation8 + $0x358] sm:$0xff]
        %v1399 = vld [vmem:[#allocation8 + $0x360] sm:$0xf]
        %v1400 = vld [vmem:[#allocation8 + $0x364] sm:$0xff]
        %v1401 = vld [vmem:[#allocation8 + $0x36c] sm:$0xff]
        %v1402 = vld [vmem:[#allocation8 + $0x374] sm:$0xff]
        %v1403 = vld [vmem:[#allocation8 + $0x37c] sm:$0xf]
        %v1404 = vld [vmem:[#allocation10] sm:$0xff]
        %v1406 = vperm.slane %v1404, 0
        %v1407 = vperm.slane %v1404, 1
        %v1408 = vperm.slane %v1404, 2
        %v1409 = vperm.slane %v1404, 3
        %v1410 = vperm.slane %v1404, 4
        %v1411 = vperm.slane %v1404, 5
        %v1412 = vperm.slane %v1404, 6
        %v1548 = vunpack.c.l.b16 %v1276
        %v1549 = vunpack.c.h.b16 %v1276
        %v1550 = vunpack.c.l.b16 %v1277
        %v1551 = vunpack.c.h.b16 %v1277
        %v1552 = vunpack.c.l.b16 %v1278
        %v1553 = vunpack.c.h.b16 %v1278
        %v1554 = vunpack.c.l.b16 %v1279
        %v1555 = vunpack.c.l.b16 %v1280
        %v1556 = vunpack.c.h.b16 %v1280
        %v1557 = vunpack.c.l.b16 %v1281
        %v1558 = vunpack.c.h.b16 %v1281
        %v1559 = vunpack.c.l.b16 %v1282
        %v1560 = vunpack.c.h.b16 %v1282
        %v1561 = vunpack.c.l.b16 %v1283
        %v1562 = vunpack.c.l.b16 %v1284
        %v1563 = vunpack.c.h.b16 %v1284
        %v1564 = vunpack.c.l.b16 %v1285
        %v1565 = vunpack.c.h.b16 %v1285
        %v1566 = vunpack.c.l.b16 %v1286
        %v1567 = vunpack.c.h.b16 %v1286
        %v1568 = vunpack.c.l.b16 %v1287
        %v1569 = vunpack.c.l.b16 %v1288
        %v1570 = vunpack.c.h.b16 %v1288
        %v1571 = vunpack.c.l.b16 %v1289
        %v1572 = vunpack.c.h.b16 %v1289
        %v1573 = vunpack.c.l.b16 %v1290
        %v1574 = vunpack.c.h.b16 %v1290
        %v1575 = vunpack.c.l.b16 %v1291
        %v1576 = vunpack.c.l.b16 %v1292
        %v1577 = vunpack.c.h.b16 %v1292
        %v1578 = vunpack.c.l.b16 %v1293
        %v1579 = vunpack.c.h.b16 %v1293
        %v1580 = vunpack.c.l.b16 %v1294
        %v1581 = vunpack.c.h.b16 %v1294
        %v1582 = vunpack.c.l.b16 %v1295
        %v1583 = vunpack.c.l.b16 %v1296
        %v1584 = vunpack.c.h.b16 %v1296
        %v1585 = vunpack.c.l.b16 %v1297
        %v1586 = vunpack.c.h.b16 %v1297
        %v1587 = vunpack.c.l.b16 %v1298
        %v1588 = vunpack.c.h.b16 %v1298
        %v1589 = vunpack.c.l.b16 %v1299
        %v1590 = vunpack.c.l.b16 %v1300
        %v1591 = vunpack.c.h.b16 %v1300
        %v1592 = vunpack.c.l.b16 %v1301
        %v1593 = vunpack.c.h.b16 %v1301
        %v1594 = vunpack.c.l.b16 %v1302
        %v1595 = vunpack.c.h.b16 %v1302
        %v1596 = vunpack.c.l.b16 %v1303
        %v1597 = vunpack.c.l.b16 %v1304
        %v1598 = vunpack.c.h.b16 %v1304
        %v1599 = vunpack.c.l.b16 %v1305
        %v1600 = vunpack.c.h.b16 %v1305
        %v1601 = vunpack.c.l.b16 %v1306
        %v1602 = vunpack.c.h.b16 %v1306
        %v1603 = vunpack.c.l.b16 %v1307
        %v1604 = vunpack.c.l.b16 %v1308
        %v1605 = vunpack.c.h.b16 %v1308
        %v1606 = vunpack.c.l.b16 %v1309
        %v1607 = vunpack.c.h.b16 %v1309
        %v1608 = vunpack.c.l.b16 %v1310
        %v1609 = vunpack.c.h.b16 %v1310
        %v1610 = vunpack.c.l.b16 %v1311
        %v1611 = vunpack.c.l.b16 %v1312
        %v1612 = vunpack.c.h.b16 %v1312
        %v1613 = vunpack.c.l.b16 %v1313
        %v1614 = vunpack.c.h.b16 %v1313
        %v1615 = vunpack.c.l.b16 %v1314
        %v1616 = vunpack.c.h.b16 %v1314
        %v1617 = vunpack.c.l.b16 %v1315
        %v1618 = vunpack.c.l.b16 %v1316
        %v1619 = vunpack.c.h.b16 %v1316
        %v1620 = vunpack.c.l.b16 %v1317
        %v1621 = vunpack.c.h.b16 %v1317
        %v1622 = vunpack.c.l.b16 %v1318
        %v1623 = vunpack.c.h.b16 %v1318
        %v1624 = vunpack.c.l.b16 %v1319
        %v1625 = vunpack.c.l.b16 %v1320
        %v1626 = vunpack.c.h.b16 %v1320
        %v1627 = vunpack.c.l.b16 %v1321
        %v1628 = vunpack.c.h.b16 %v1321
        %v1629 = vunpack.c.l.b16 %v1322
        %v1630 = vunpack.c.h.b16 %v1322
        %v1631 = vunpack.c.l.b16 %v1323
        %v1632 = vunpack.c.l.b16 %v1324
        %v1633 = vunpack.c.h.b16 %v1324
        %v1634 = vunpack.c.l.b16 %v1325
        %v1635 = vunpack.c.h.b16 %v1325
        %v1636 = vunpack.c.l.b16 %v1326
        %v1637 = vunpack.c.h.b16 %v1326
        %v1638 = vunpack.c.l.b16 %v1327
        %v1639 = vunpack.c.l.b16 %v1328
        %v1640 = vunpack.c.h.b16 %v1328
        %v1641 = vunpack.c.l.b16 %v1329
        %v1642 = vunpack.c.h.b16 %v1329
        %v1643 = vunpack.c.l.b16 %v1330
        %v1644 = vunpack.c.h.b16 %v1330
        %v1645 = vunpack.c.l.b16 %v1331
        %v1646 = vunpack.c.l.b16 %v1332
        %v1647 = vunpack.c.h.b16 %v1332
        %v1648 = vunpack.c.l.b16 %v1333
        %v1649 = vunpack.c.h.b16 %v1333
        %v1650 = vunpack.c.l.b16 %v1334
        %v1651 = vunpack.c.h.b16 %v1334
        %v1652 = vunpack.c.l.b16 %v1335
        %v1653 = vunpack.c.l.b16 %v1336
        %v1654 = vunpack.c.h.b16 %v1336
        %v1655 = vunpack.c.l.b16 %v1337
        %v1656 = vunpack.c.h.b16 %v1337
        %v1657 = vunpack.c.l.b16 %v1338
        %v1658 = vunpack.c.h.b16 %v1338
        %v1659 = vunpack.c.l.b16 %v1339
        %v1660 = vunpack.c.l.b16 %v1340
        %v1661 = vunpack.c.h.b16 %v1340
        %v1662 = vunpack.c.l.b16 %v1341
        %v1663 = vunpack.c.h.b16 %v1341
        %v1664 = vunpack.c.l.b16 %v1342
        %v1665 = vunpack.c.h.b16 %v1342
        %v1666 = vunpack.c.l.b16 %v1343
        %v1667 = vunpack.c.l.b16 %v1344
        %v1668 = vunpack.c.h.b16 %v1344
        %v1669 = vunpack.c.l.b16 %v1345
        %v1670 = vunpack.c.h.b16 %v1345
        %v1671 = vunpack.c.l.b16 %v1346
        %v1672 = vunpack.c.h.b16 %v1346
        %v1673 = vunpack.c.l.b16 %v1347
        %v1674 = vunpack.c.l.b16 %v1348
        %v1675 = vunpack.c.h.b16 %v1348
        %v1676 = vunpack.c.l.b16 %v1349
        %v1677 = vunpack.c.h.b16 %v1349
        %v1678 = vunpack.c.l.b16 %v1350
        %v1679 = vunpack.c.h.b16 %v1350
        %v1680 = vunpack.c.l.b16 %v1351
        %v1681 = vunpack.c.l.b16 %v1352
        %v1682 = vunpack.c.h.b16 %v1352
        %v1683 = vunpack.c.l.b16 %v1353
        %v1684 = vunpack.c.h.b16 %v1353
        %v1685 = vunpack.c.l.b16 %v1354
        %v1686 = vunpack.c.h.b16 %v1354
        %v1687 = vunpack.c.l.b16 %v1355
        %v1688 = vunpack.c.l.b16 %v1356
        %v1689 = vunpack.c.h.b16 %v1356
        %v1690 = vunpack.c.l.b16 %v1357
        %v1691 = vunpack.c.h.b16 %v1357
        %v1692 = vunpack.c.l.b16 %v1358
        %v1693 = vunpack.c.h.b16 %v1358
        %v1694 = vunpack.c.l.b16 %v1359
        %v1695 = vunpack.c.l.b16 %v1360
        %v1696 = vunpack.c.h.b16 %v1360
        %v1697 = vunpack.c.l.b16 %v1361
        %v1698 = vunpack.c.h.b16 %v1361
        %v1699 = vunpack.c.l.b16 %v1362
        %v1700 = vunpack.c.h.b16 %v1362
        %v1701 = vunpack.c.l.b16 %v1363
        %v1702 = vunpack.c.l.b16 %v1364
        %v1703 = vunpack.c.h.b16 %v1364
        %v1704 = vunpack.c.l.b16 %v1365
        %v1705 = vunpack.c.h.b16 %v1365
        %v1706 = vunpack.c.l.b16 %v1366
        %v1707 = vunpack.c.h.b16 %v1366
        %v1708 = vunpack.c.l.b16 %v1367
        %v1709 = vunpack.c.l.b16 %v1368
        %v1710 = vunpack.c.h.b16 %v1368
        %v1711 = vunpack.c.l.b16 %v1369
        %v1712 = vunpack.c.h.b16 %v1369
        %v1713 = vunpack.c.l.b16 %v1370
        %v1714 = vunpack.c.h.b16 %v1370
        %v1715 = vunpack.c.l.b16 %v1371
        %v1716 = vunpack.c.l.b16 %v1372
        %v1717 = vunpack.c.h.b16 %v1372
        %v1718 = vunpack.c.l.b16 %v1373
        %v1719 = vunpack.c.h.b16 %v1373
        %v1720 = vunpack.c.l.b16 %v1374
        %v1721 = vunpack.c.h.b16 %v1374
        %v1722 = vunpack.c.l.b16 %v1375
        %v1723 = vunpack.c.l.b16 %v1376
        %v1724 = vunpack.c.h.b16 %v1376
        %v1725 = vunpack.c.l.b16 %v1377
        %v1726 = vunpack.c.h.b16 %v1377
        %v1727 = vunpack.c.l.b16 %v1378
        %v1728 = vunpack.c.h.b16 %v1378
        %v1729 = vunpack.c.l.b16 %v1379
        %v1730 = vunpack.c.l.b16 %v1380
        %v1731 = vunpack.c.h.b16 %v1380
        %v1732 = vunpack.c.l.b16 %v1381
        %v1733 = vunpack.c.h.b16 %v1381
        %v1734 = vunpack.c.l.b16 %v1382
        %v1735 = vunpack.c.h.b16 %v1382
        %v1736 = vunpack.c.l.b16 %v1383
        %v1737 = vunpack.c.l.b16 %v1384
        %v1738 = vunpack.c.h.b16 %v1384
        %v1739 = vunpack.c.l.b16 %v1385
        %v1740 = vunpack.c.h.b16 %v1385
        %v1741 = vunpack.c.l.b16 %v1386
        %v1742 = vunpack.c.h.b16 %v1386
        %v1743 = vunpack.c.l.b16 %v1387
        %v1744 = vunpack.c.l.b16 %v1388
        %v1745 = vunpack.c.h.b16 %v1388
        %v1746 = vunpack.c.l.b16 %v1389
        %v1747 = vunpack.c.h.b16 %v1389
        %v1748 = vunpack.c.l.b16 %v1390
        %v1749 = vunpack.c.h.b16 %v1390
        %v1750 = vunpack.c.l.b16 %v1391
        %v1751 = vunpack.c.l.b16 %v1392
        %v1752 = vunpack.c.h.b16 %v1392
        %v1753 = vunpack.c.l.b16 %v1393
        %v1754 = vunpack.c.h.b16 %v1393
        %v1755 = vunpack.c.l.b16 %v1394
        %v1756 = vunpack.c.h.b16 %v1394
        %v1757 = vunpack.c.l.b16 %v1395
        %v1758 = vunpack.c.l.b16 %v1396
        %v1759 = vunpack.c.h.b16 %v1396
        %v1760 = vunpack.c.l.b16 %v1397
        %v1761 = vunpack.c.h.b16 %v1397
        %v1762 = vunpack.c.l.b16 %v1398
        %v1763 = vunpack.c.h.b16 %v1398
        %v1764 = vunpack.c.l.b16 %v1399
        %v1765 = vunpack.c.l.b16 %v1400
        %v1766 = vunpack.c.h.b16 %v1400
        %v1767 = vunpack.c.l.b16 %v1401
        %v1768 = vunpack.c.h.b16 %v1401
        %v1769 = vunpack.c.l.b16 %v1402
        %v1770 = vunpack.c.h.b16 %v1402
        %v1771 = vunpack.c.l.b16 %v1403
        %v1772 = vpack.c.b16 %v1555, %v1548
        %v1773 = vpack.c.b16 %v1556, %v1549
        %v1774 = vpack.c.b16 %v1557, %v1550
        %v1775 = vpack.c.b16 %v1558, %v1551
        %v1776 = vpack.c.b16 %v1559, %v1552
        %v1777 = vpack.c.b16 %v1560, %v1553
        %v1778 = vpack.c.b16 %v1561, %v1554
        %v1779 = vpack.c.b16 %v1569, %v1562
        %v1780 = vpack.c.b16 %v1570, %v1563
        %v1781 = vpack.c.b16 %v1571, %v1564
        %v1782 = vpack.c.b16 %v1572, %v1565
        %v1783 = vpack.c.b16 %v1573, %v1566
        %v1784 = vpack.c.b16 %v1574, %v1567
        %v1785 = vpack.c.b16 %v1575, %v1568
        %v1786 = vpack.c.b16 %v1583, %v1576
        %v1787 = vpack.c.b16 %v1584, %v1577
        %v1788 = vpack.c.b16 %v1585, %v1578
        %v1789 = vpack.c.b16 %v1586, %v1579
        %v1790 = vpack.c.b16 %v1587, %v1580
        %v1791 = vpack.c.b16 %v1588, %v1581
        %v1792 = vpack.c.b16 %v1589, %v1582
        %v1793 = vpack.c.b16 %v1597, %v1590
        %v1794 = vpack.c.b16 %v1598, %v1591
        %v1795 = vpack.c.b16 %v1599, %v1592
        %v1796 = vpack.c.b16 %v1600, %v1593
        %v1797 = vpack.c.b16 %v1601, %v1594
        %v1798 = vpack.c.b16 %v1602, %v1595
        %v1799 = vpack.c.b16 %v1603, %v1596
        %v1800 = vpack.c.b16 %v1611, %v1604
        %v1801 = vpack.c.b16 %v1612, %v1605
        %v1802 = vpack.c.b16 %v1613, %v1606
        %v1803 = vpack.c.b16 %v1614, %v1607
        %v1804 = vpack.c.b16 %v1615, %v1608
        %v1805 = vpack.c.b16 %v1616, %v1609
        %v1806 = vpack.c.b16 %v1617, %v1610
        %v1807 = vpack.c.b16 %v1625, %v1618
        %v1808 = vpack.c.b16 %v1626, %v1619
        %v1809 = vpack.c.b16 %v1627, %v1620
        %v1810 = vpack.c.b16 %v1628, %v1621
        %v1811 = vpack.c.b16 %v1629, %v1622
        %v1812 = vpack.c.b16 %v1630, %v1623
        %v1813 = vpack.c.b16 %v1631, %v1624
        %v1814 = vpack.c.b16 %v1639, %v1632
        %v1815 = vpack.c.b16 %v1640, %v1633
        %v1816 = vpack.c.b16 %v1641, %v1634
        %v1817 = vpack.c.b16 %v1642, %v1635
        %v1818 = vpack.c.b16 %v1643, %v1636
        %v1819 = vpack.c.b16 %v1644, %v1637
        %v1820 = vpack.c.b16 %v1645, %v1638
        %v1821 = vpack.c.b16 %v1653, %v1646
        %v1822 = vpack.c.b16 %v1654, %v1647
        %v1823 = vpack.c.b16 %v1655, %v1648
        %v1824 = vpack.c.b16 %v1656, %v1649
        %v1825 = vpack.c.b16 %v1657, %v1650
        %v1826 = vpack.c.b16 %v1658, %v1651
        %v1827 = vpack.c.b16 %v1659, %v1652
        %v1828 = vpack.c.b16 %v1667, %v1660
        %v1829 = vpack.c.b16 %v1668, %v1661
        %v1830 = vpack.c.b16 %v1669, %v1662
        %v1831 = vpack.c.b16 %v1670, %v1663
        %v1832 = vpack.c.b16 %v1671, %v1664
        %v1833 = vpack.c.b16 %v1672, %v1665
        %v1834 = vpack.c.b16 %v1673, %v1666
        %v1835 = vpack.c.b16 %v1681, %v1674
        %v1836 = vpack.c.b16 %v1682, %v1675
        %v1837 = vpack.c.b16 %v1683, %v1676
        %v1838 = vpack.c.b16 %v1684, %v1677
        %v1839 = vpack.c.b16 %v1685, %v1678
        %v1840 = vpack.c.b16 %v1686, %v1679
        %v1841 = vpack.c.b16 %v1687, %v1680
        %v1842 = vpack.c.b16 %v1695, %v1688
        %v1843 = vpack.c.b16 %v1696, %v1689
        %v1844 = vpack.c.b16 %v1697, %v1690
        %v1845 = vpack.c.b16 %v1698, %v1691
        %v1846 = vpack.c.b16 %v1699, %v1692
        %v1847 = vpack.c.b16 %v1700, %v1693
        %v1848 = vpack.c.b16 %v1701, %v1694
        %v1849 = vpack.c.b16 %v1709, %v1702
        %v1850 = vpack.c.b16 %v1710, %v1703
        %v1851 = vpack.c.b16 %v1711, %v1704
        %v1852 = vpack.c.b16 %v1712, %v1705
        %v1853 = vpack.c.b16 %v1713, %v1706
        %v1854 = vpack.c.b16 %v1714, %v1707
        %v1855 = vpack.c.b16 %v1715, %v1708
        %v1856 = vpack.c.b16 %v1723, %v1716
        %v1857 = vpack.c.b16 %v1724, %v1717
        %v1858 = vpack.c.b16 %v1725, %v1718
        %v1859 = vpack.c.b16 %v1726, %v1719
        %v1860 = vpack.c.b16 %v1727, %v1720
        %v1861 = vpack.c.b16 %v1728, %v1721
        %v1862 = vpack.c.b16 %v1729, %v1722
        %v1863 = vpack.c.b16 %v1737, %v1730
        %v1864 = vpack.c.b16 %v1738, %v1731
        %v1865 = vpack.c.b16 %v1739, %v1732
        %v1866 = vpack.c.b16 %v1740, %v1733
        %v1867 = vpack.c.b16 %v1741, %v1734
        %v1868 = vpack.c.b16 %v1742, %v1735
        %v1869 = vpack.c.b16 %v1743, %v1736
        %v1870 = vpack.c.b16 %v1751, %v1744
        %v1871 = vpack.c.b16 %v1752, %v1745
        %v1872 = vpack.c.b16 %v1753, %v1746
        %v1873 = vpack.c.b16 %v1754, %v1747
        %v1874 = vpack.c.b16 %v1755, %v1748
        %v1875 = vpack.c.b16 %v1756, %v1749
        %v1876 = vpack.c.b16 %v1757, %v1750
        %v1877 = vpack.c.b16 %v1765, %v1758
        %v1878 = vpack.c.b16 %v1766, %v1759
        %v1879 = vpack.c.b16 %v1767, %v1760
        %v1880 = vpack.c.b16 %v1768, %v1761
        %v1881 = vpack.c.b16 %v1769, %v1762
        %v1882 = vpack.c.b16 %v1770, %v1763
        %v1883 = vpack.c.b16 %v1771, %v1764
        %1996 = vmatpush.bf16.msra.mxu0 %v1821
        %1997 = vmatpush.bf16.msra.mxu0 %v1814
        %1998 = vmatpush.bf16.msra.mxu0 %v1807
        %1999 = vmatpush.bf16.msra.mxu0 %v1800
        %2000 = vmatpush.bf16.msra.mxu0 %v1793
        %2001 = vmatpush.bf16.msra.mxu0 %v1786
        %2002 = vmatpush.bf16.msra.mxu0 %v1779
        %2003 = vmatpush.bf16.msra.mxu0 %v1772
        %2004 = vmatmul.bf16.gmra.mxu0 %v1274
        %v2005 = vpop.f32.mrf.mxu0
        %v2006 = vadd.f32 %v1406, %v2005
        %v2007 = vpop.f32.mrf.mxu0
        %2008 = vdwg.mxu0
        %2009 = vmatpush.bf16.msra.mxu0 %v1877
        %2010 = vmatpush.bf16.msra.mxu0 %v1870
        %2011 = vmatpush.bf16.msra.mxu0 %v1863
        %2012 = vmatpush.bf16.msra.mxu0 %v1856
        %2013 = vmatpush.bf16.msra.mxu0 %v1849
        %2014 = vmatpush.bf16.msra.mxu0 %v1842
        %2015 = vmatpush.bf16.msra.mxu0 %v1835
        %2016 = vmatpush.bf16.msra.mxu0 %v1828
        %2017 = vmatmul.bf16.gmra.mxu0 %v1275
        %v2018 = vpop.f32.mrf.mxu0
        %v2019 = vadd.f32 %v2006, %v2018
        %v2020 = vpop.f32.mrf.mxu0
        %2021 = vdwg.mxu0
        %2022 = vmatpush.bf16.msra.mxu0 %v1822
        %2023 = vmatpush.bf16.msra.mxu0 %v1815
        %2024 = vmatpush.bf16.msra.mxu0 %v1808
        %2025 = vmatpush.bf16.msra.mxu0 %v1801
        %2026 = vmatpush.bf16.msra.mxu0 %v1794
        %2027 = vmatpush.bf16.msra.mxu0 %v1787
        %2028 = vmatpush.bf16.msra.mxu0 %v1780
        %2029 = vmatpush.bf16.msra.mxu0 %v1773
        %2030 = vmatmul.bf16.gmra.mxu0 %v1274
        %v2031 = vpop.f32.mrf.mxu0
        %v2032 = vadd.f32 %v1407, %v2031
        %v2033 = vpop.f32.mrf.mxu0
        %2034 = vdwg.mxu0
        %2035 = vmatpush.bf16.msra.mxu0 %v1878
        %2036 = vmatpush.bf16.msra.mxu0 %v1871
        %2037 = vmatpush.bf16.msra.mxu0 %v1864
        %2038 = vmatpush.bf16.msra.mxu0 %v1857
        %2039 = vmatpush.bf16.msra.mxu0 %v1850
        %2040 = vmatpush.bf16.msra.mxu0 %v1843
        %2041 = vmatpush.bf16.msra.mxu0 %v1836
        %2042 = vmatpush.bf16.msra.mxu0 %v1829
        %2043 = vmatmul.bf16.gmra.mxu0 %v1275
        %v2044 = vpop.f32.mrf.mxu0
        %v2045 = vadd.f32 %v2032, %v2044
        %v2046 = vpop.f32.mrf.mxu0
        %2047 = vdwg.mxu0
        %2048 = vmatpush.bf16.msra.mxu0 %v1823
        %2049 = vmatpush.bf16.msra.mxu0 %v1816
        %2050 = vmatpush.bf16.msra.mxu0 %v1809
        %2051 = vmatpush.bf16.msra.mxu0 %v1802
        %2052 = vmatpush.bf16.msra.mxu0 %v1795
        %2053 = vmatpush.bf16.msra.mxu0 %v1788
        %2054 = vmatpush.bf16.msra.mxu0 %v1781
        %2055 = vmatpush.bf16.msra.mxu0 %v1774
        %2056 = vmatmul.bf16.gmra.mxu0 %v1274
        %v2057 = vpop.f32.mrf.mxu0
        %v2058 = vadd.f32 %v1408, %v2057
        %v2059 = vpop.f32.mrf.mxu0
        %2060 = vdwg.mxu0
        %2061 = vmatpush.bf16.msra.mxu0 %v1879
        %2062 = vmatpush.bf16.msra.mxu0 %v1872
        %2063 = vmatpush.bf16.msra.mxu0 %v1865
        %2064 = vmatpush.bf16.msra.mxu0 %v1858
        %2065 = vmatpush.bf16.msra.mxu0 %v1851
        %2066 = vmatpush.bf16.msra.mxu0 %v1844
        %2067 = vmatpush.bf16.msra.mxu0 %v1837
        %2068 = vmatpush.bf16.msra.mxu0 %v1830
        %2069 = vmatmul.bf16.gmra.mxu0 %v1275
        %v2070 = vpop.f32.mrf.mxu0
        %v2071 = vadd.f32 %v2058, %v2070
        %v2072 = vpop.f32.mrf.mxu0
        %2073 = vdwg.mxu0
        %2074 = vmatpush.bf16.msra.mxu0 %v1824
        %2075 = vmatpush.bf16.msra.mxu0 %v1817
        %2076 = vmatpush.bf16.msra.mxu0 %v1810
        %2077 = vmatpush.bf16.msra.mxu0 %v1803
        %2078 = vmatpush.bf16.msra.mxu0 %v1796
        %2079 = vmatpush.bf16.msra.mxu0 %v1789
        %2080 = vmatpush.bf16.msra.mxu0 %v1782
        %2081 = vmatpush.bf16.msra.mxu0 %v1775
        %2082 = vmatmul.bf16.gmra.mxu0 %v1274
        %v2083 = vpop.f32.mrf.mxu0
        %v2084 = vadd.f32 %v1409, %v2083
        %v2085 = vpop.f32.mrf.mxu0
        %2086 = vdwg.mxu0
        %2087 = vmatpush.bf16.msra.mxu0 %v1880
        %2088 = vmatpush.bf16.msra.mxu0 %v1873
        %2089 = vmatpush.bf16.msra.mxu0 %v1866
        %2090 = vmatpush.bf16.msra.mxu0 %v1859
        %2091 = vmatpush.bf16.msra.mxu0 %v1852
        %2092 = vmatpush.bf16.msra.mxu0 %v1845
        %2093 = vmatpush.bf16.msra.mxu0 %v1838
        %2094 = vmatpush.bf16.msra.mxu0 %v1831
        %2095 = vmatmul.bf16.gmra.mxu0 %v1275
        %v2096 = vpop.f32.mrf.mxu0
        %v2097 = vadd.f32 %v2084, %v2096
        %v2098 = vpop.f32.mrf.mxu0
        %2099 = vdwg.mxu0
        %2100 = vmatpush.bf16.msra.mxu0 %v1825
        %2101 = vmatpush.bf16.msra.mxu0 %v1818
        %2102 = vmatpush.bf16.msra.mxu0 %v1811
        %2103 = vmatpush.bf16.msra.mxu0 %v1804
        %2104 = vmatpush.bf16.msra.mxu0 %v1797
        %2105 = vmatpush.bf16.msra.mxu0 %v1790
        %2106 = vmatpush.bf16.msra.mxu0 %v1783
        %2107 = vmatpush.bf16.msra.mxu0 %v1776
        %2108 = vmatmul.bf16.gmra.mxu0 %v1274
        %v2109 = vpop.f32.mrf.mxu0
        %v2110 = vadd.f32 %v1410, %v2109
        %v2111 = vpop.f32.mrf.mxu0
        %2112 = vdwg.mxu0
        %2113 = vmatpush.bf16.msra.mxu0 %v1881
        %2114 = vmatpush.bf16.msra.mxu0 %v1874
        %2115 = vmatpush.bf16.msra.mxu0 %v1867
        %2116 = vmatpush.bf16.msra.mxu0 %v1860
        %2117 = vmatpush.bf16.msra.mxu0 %v1853
        %2118 = vmatpush.bf16.msra.mxu0 %v1846
        %2119 = vmatpush.bf16.msra.mxu0 %v1839
        %2120 = vmatpush.bf16.msra.mxu0 %v1832
        %2121 = vmatmul.bf16.gmra.mxu0 %v1275
        %v2122 = vpop.f32.mrf.mxu0
        %v2123 = vadd.f32 %v2110, %v2122
        %v2124 = vpop.f32.mrf.mxu0
        %2125 = vdwg.mxu0
        %2126 = vmatpush.bf16.msra.mxu0 %v1826
        %2127 = vmatpush.bf16.msra.mxu0 %v1819
        %2128 = vmatpush.bf16.msra.mxu0 %v1812
        %2129 = vmatpush.bf16.msra.mxu0 %v1805
        %2130 = vmatpush.bf16.msra.mxu0 %v1798
        %2131 = vmatpush.bf16.msra.mxu0 %v1791
        %2132 = vmatpush.bf16.msra.mxu0 %v1784
        %2133 = vmatpush.bf16.msra.mxu0 %v1777
        %2134 = vmatmul.bf16.gmra.mxu0 %v1274
        %v2135 = vpop.f32.mrf.mxu0
        %v2136 = vadd.f32 %v1411, %v2135
        %v2137 = vpop.f32.mrf.mxu0
        %2138 = vdwg.mxu0
        %2139 = vmatpush.bf16.msra.mxu0 %v1882
        %2140 = vmatpush.bf16.msra.mxu0 %v1875
        %2141 = vmatpush.bf16.msra.mxu0 %v1868
        %2142 = vmatpush.bf16.msra.mxu0 %v1861
        %2143 = vmatpush.bf16.msra.mxu0 %v1854
        %2144 = vmatpush.bf16.msra.mxu0 %v1847
        %2145 = vmatpush.bf16.msra.mxu0 %v1840
        %2146 = vmatpush.bf16.msra.mxu0 %v1833
        %2147 = vmatmul.bf16.gmra.mxu0 %v1275
        %v2148 = vpop.f32.mrf.mxu0
        %v2149 = vadd.f32 %v2136, %v2148
        %v2150 = vpop.f32.mrf.mxu0
        %2151 = vdwg.mxu0
        %2152 = vmatpush.bf16.msra.mxu0 %v1827
        %2153 = vmatpush.bf16.msra.mxu0 %v1820
        %2154 = vmatpush.bf16.msra.mxu0 %v1813
        %2155 = vmatpush.bf16.msra.mxu0 %v1806
        %2156 = vmatpush.bf16.msra.mxu0 %v1799
        %2157 = vmatpush.bf16.msra.mxu0 %v1792
        %2158 = vmatpush.bf16.msra.mxu0 %v1785
        %2159 = vmatpush.bf16.msra.mxu0 %v1778
        %2160 = vmatmul.bf16.gmra.mxu0 %v1274
        %v2161 = vpop.f32.mrf.mxu0
        %v2162 = vadd.f32 %v1412, %v2161
        %v2163 = vpop.f32.mrf.mxu0
        %2164 = vdwg.mxu0
        %2165 = vmatpush.bf16.msra.mxu0 %v1883
        %2166 = vmatpush.bf16.msra.mxu0 %v1876
        %2167 = vmatpush.bf16.msra.mxu0 %v1869
        %2168 = vmatpush.bf16.msra.mxu0 %v1862
        %2169 = vmatpush.bf16.msra.mxu0 %v1855
        %2170 = vmatpush.bf16.msra.mxu0 %v1848
        %2171 = vmatpush.bf16.msra.mxu0 %v1841
        %2172 = vmatpush.bf16.msra.mxu0 %v1834
        %2173 = vmatmul.bf16.gmra.mxu0 %v1275
        %v2174 = vpop.f32.mrf.mxu0
        %v2175 = vadd.f32 %v2162, %v2174
        %v2176 = vpop.f32.mrf.mxu0
        %2177 = vdwg.mxu0
        %v2178 = vxor.u32 %v2019, 2147483648
        %v2179 = vxor.u32 %v2045, 2147483648
        %v2180 = vxor.u32 %v2071, 2147483648
        %v2181 = vxor.u32 %v2097, 2147483648
        %v2182 = vxor.u32 %v2123, 2147483648
        %v2183 = vxor.u32 %v2149, 2147483648
        %v2184 = vxor.u32 %v2175, 2147483648
        %v2185 = vmul.f32 %v2178, 1.442695
        %v2186 = vpow.pop %v2185
        %v2187 = vmul.f32 %v2179, 1.442695
        %v2188 = vpow.pop %v2187
        %v2189 = vmul.f32 %v2180, 1.442695
        %v2190 = vpow.pop %v2189
        %v2191 = vmul.f32 %v2181, 1.442695
        %v2192 = vpow.pop %v2191
        %v2193 = vmul.f32 %v2182, 1.442695
        %v2194 = vpow.pop %v2193
        %v2195 = vmul.f32 %v2183, 1.442695
        %v2196 = vpow.pop %v2195
        %v2197 = vmul.f32 %v2184, 1.442695
        %v2198 = vpow.pop %v2197
        %v2199 = vadd.f32 %v2186, 1.0
        %v2200 = vadd.f32 %v2188, 1.0
        %v2201 = vadd.f32 %v2190, 1.0
        %v2202 = vadd.f32 %v2192, 1.0
        %v2203 = vadd.f32 %v2194, 1.0
        %v2204 = vadd.f32 %v2196, 1.0
        %v2205 = vadd.f32 %v2198, 1.0
        %v2206 = vrcp.pop %v2199
        %v2207 = vmul.f32 %v2199, %v2206
        %v2208 = vsub.f32 1.0, %v2207
        %v2209 = vmul.f32 %v2206, %v2208
        %v2210 = vadd.f32 %v2206, %v2209
        %vm2211 = vweird.f32 %v2199
        %vm2212 = vweird.f32 %v2206
        %vm2213 = vmor %vm2211, %vm2212
        %v2214 = vsel %vm2213, %v2206, %v2210
        %v2215 = vand.u32 2147483647, %v2199
        %vm2216 = vcmp.eq.f32.partialorder %v2215, 8.507059e+37
        %v2217 = vand.u32 %v2199, 2147483648
        %v2218 = vor.u32 1.1754944e-38, %v2217
        %v2219 = vsel %vm2216, %v2218, %v2214
        %v2220 = vmul.f32 1.0, %v2219
        %v2221 = vrcp.pop %v2200
        %v2222 = vmul.f32 %v2200, %v2221
        %v2223 = vsub.f32 1.0, %v2222
        %v2224 = vmul.f32 %v2221, %v2223
        %v2225 = vadd.f32 %v2221, %v2224
        %vm2226 = vweird.f32 %v2200
        %vm2227 = vweird.f32 %v2221
        %vm2228 = vmor %vm2226, %vm2227
        %v2229 = vsel %vm2228, %v2221, %v2225
        %v2230 = vand.u32 2147483647, %v2200
        %vm2231 = vcmp.eq.f32.partialorder %v2230, 8.507059e+37
        %v2232 = vand.u32 %v2200, 2147483648
        %v2233 = vor.u32 1.1754944e-38, %v2232
        %v2234 = vsel %vm2231, %v2233, %v2229
        %v2235 = vmul.f32 1.0, %v2234
        %v2236 = vrcp.pop %v2201
        %v2237 = vmul.f32 %v2201, %v2236
        %v2238 = vsub.f32 1.0, %v2237
        %v2239 = vmul.f32 %v2236, %v2238
        %v2240 = vadd.f32 %v2236, %v2239
        %vm2241 = vweird.f32 %v2201
        %vm2242 = vweird.f32 %v2236
        %vm2243 = vmor %vm2241, %vm2242
        %v2244 = vsel %vm2243, %v2236, %v2240
        %v2245 = vand.u32 2147483647, %v2201
        %vm2246 = vcmp.eq.f32.partialorder %v2245, 8.507059e+37
        %v2247 = vand.u32 %v2201, 2147483648
        %v2248 = vor.u32 1.1754944e-38, %v2247
        %v2249 = vsel %vm2246, %v2248, %v2244
        %v2250 = vmul.f32 1.0, %v2249
        %v2251 = vrcp.pop %v2202
        %v2252 = vmul.f32 %v2202, %v2251
        %v2253 = vsub.f32 1.0, %v2252
        %v2254 = vmul.f32 %v2251, %v2253
        %v2255 = vadd.f32 %v2251, %v2254
        %vm2256 = vweird.f32 %v2202
        %vm2257 = vweird.f32 %v2251
        %vm2258 = vmor %vm2256, %vm2257
        %v2259 = vsel %vm2258, %v2251, %v2255
        %v2260 = vand.u32 2147483647, %v2202
        %vm2261 = vcmp.eq.f32.partialorder %v2260, 8.507059e+37
        %v2262 = vand.u32 %v2202, 2147483648
        %v2263 = vor.u32 1.1754944e-38, %v2262
        %v2264 = vsel %vm2261, %v2263, %v2259
        %v2265 = vmul.f32 1.0, %v2264
        %v2266 = vrcp.pop %v2203
        %v2267 = vmul.f32 %v2203, %v2266
        %v2268 = vsub.f32 1.0, %v2267
        %v2269 = vmul.f32 %v2266, %v2268
        %v2270 = vadd.f32 %v2266, %v2269
        %vm2271 = vweird.f32 %v2203
        %vm2272 = vweird.f32 %v2266
        %vm2273 = vmor %vm2271, %vm2272
        %v2274 = vsel %vm2273, %v2266, %v2270
        %v2275 = vand.u32 2147483647, %v2203
        %vm2276 = vcmp.eq.f32.partialorder %v2275, 8.507059e+37
        %v2277 = vand.u32 %v2203, 2147483648
        %v2278 = vor.u32 1.1754944e-38, %v2277
        %v2279 = vsel %vm2276, %v2278, %v2274
        %v2280 = vmul.f32 1.0, %v2279
        %v2281 = vrcp.pop %v2204
        %v2282 = vmul.f32 %v2204, %v2281
        %v2283 = vsub.f32 1.0, %v2282
        %v2284 = vmul.f32 %v2281, %v2283
        %v2285 = vadd.f32 %v2281, %v2284
        %vm2286 = vweird.f32 %v2204
        %vm2287 = vweird.f32 %v2281
        %vm2288 = vmor %vm2286, %vm2287
        %v2289 = vsel %vm2288, %v2281, %v2285
        %v2290 = vand.u32 2147483647, %v2204
        %vm2291 = vcmp.eq.f32.partialorder %v2290, 8.507059e+37
        %v2292 = vand.u32 %v2204, 2147483648
        %v2293 = vor.u32 1.1754944e-38, %v2292
        %v2294 = vsel %vm2291, %v2293, %v2289
        %v2295 = vmul.f32 1.0, %v2294
        %v2296 = vrcp.pop %v2205
        %v2297 = vmul.f32 %v2205, %v2296
        %v2298 = vsub.f32 1.0, %v2297
        %v2299 = vmul.f32 %v2296, %v2298
        %v2300 = vadd.f32 %v2296, %v2299
        %vm2301 = vweird.f32 %v2205
        %vm2302 = vweird.f32 %v2296
        %vm2303 = vmor %vm2301, %vm2302
        %v2304 = vsel %vm2303, %v2296, %v2300
        %v2305 = vand.u32 2147483647, %v2205
        %vm2306 = vcmp.eq.f32.partialorder %v2305, 8.507059e+37
        %v2307 = vand.u32 %v2205, 2147483648
        %v2308 = vor.u32 1.1754944e-38, %v2307
        %v2309 = vsel %vm2306, %v2308, %v2304
        %v2310 = vmul.f32 1.0, %v2309
        %2311 = vst [vmem:[%s335] sm:$0xff] %v2220
        %2312 = vst [vmem:[%s335 + $0x8] sm:$0xff] %v2235
        %2313 = vst [vmem:[%s335 + $0x10] sm:$0xff] %v2250
        %2314 = vst [vmem:[%s335 + $0x18] sm:$0xff] %v2265
        %2315 = vst [vmem:[%s335 + $0x20] sm:$0xff] %v2280
        %2316 = vst [vmem:[%s335 + $0x28] sm:$0xff] %v2295
        %2317 = vst [vmem:[%s335 + $0x30] sm:$0xff] %v2310
        %2318 = vst [vmem:[%s342] sm:$0xff] %v1272
        %2319 = vst [vmem:[%s342 + $0x8] sm:$0xff] %v1273
        %s2320 = sand.u32 %s147, 1
        %s2321 = scalar_lea.sflag [#allocation4], %s2320
        %s2322 = sand.u32 %s147, 1
        %s2323 = smul.addr %s2322, 56
        %s2324 = scalar_lea.vmem [#allocation11], %s2323
        %s2325 = sand.u32 %s173, 1
        %s2326 = scalar_lea.sflag [#allocation13], %s2325
        %s2327 = sand.u32 %s173, 1
        %s2328 = smul.addr %s2327, 16
        %s2329 = scalar_lea.vmem [#allocation12], %s2328
        // Predicated region
        $region68: #{tpu_custom_call.1} parent=39 // pred_check
          %p2330 = pneg %p157
        $region69: #{tpu_custom_call.1} parent=39 // pred_check_branch
          %2332 = sbr.rel (%p2330) target = $region71
        $region70: #{tpu_custom_call.1} parent=39 // pred_region
          %2334 = vsyncadd %s2321, 0
          %s2335 = smul.addr %s29, 7
          %s2336 = smul.addr %s2335, 8
          %s2337 = scalar_lea.hbm %s5, %s2336
          %s2339 = sshll.u32 %s2324, 4
          %s2340 = int_to_ptr.vmem [resolvable:$true] %s2339
          %s2341 = sshll.u32 %s2337, 4
          %s2342 = int_to_ptr.hbm [resolvable:$true] %s2341
          %2344 = dma.vmem_to_hbm [thread:$0]  %s2340, 896, %s2342, %s2321
        $region71: #{tpu_custom_call.1} parent=39 // pred_fallthru
          _
        // Predicated region
        $region72: #{tpu_custom_call.1} parent=39 // pred_check
          %p2345 = pneg %p183
        $region73: #{tpu_custom_call.1} parent=39 // pred_check_branch
          %2347 = sbr.rel (%p2345) target = $region75
        $region74: #{tpu_custom_call.1} parent=39 // pred_region
          %2349 = vsyncadd %s2326, 0
          %s2350 = smul.addr %s29, 2
          %s2351 = smul.addr %s2350, 8
          %s2352 = scalar_lea.hbm %s6, %s2351
          %s2354 = sshll.u32 %s2329, 4
          %s2355 = int_to_ptr.vmem [resolvable:$true] %s2354
          %s2356 = sshll.u32 %s2352, 4
          %s2357 = int_to_ptr.hbm [resolvable:$true] %s2356
          %2359 = dma.vmem_to_hbm [thread:$0]  %s2355, 256, %s2357, %s2326
        $region75: #{tpu_custom_call.1} parent=39 // pred_fallthru
          _
      $region40: #{tpu_custom_call.1} parent=5 // pred_fallthru
        _
      %p2360 = scmp.le.s32.totalorder 2, %s24
      // Predicated region
      $region76: #{tpu_custom_call.1} parent=5 // pred_check
        %p2361 = pneg %p2360
      $region77: #{tpu_custom_call.1} parent=5 // pred_check_branch
        %2363 = sbr.rel (%p2361) target = $region79
      $region78: #{tpu_custom_call.1} parent=5 // pred_region
        %s2364 = ssub.s32 %s24, 2
        // Predicated region
        $region80: #{tpu_custom_call.1} parent=78 // pred_check
          %p2365 = pneg %p163
        $region81: #{tpu_custom_call.1} parent=78 // pred_check_branch
          %2367 = sbr.rel (%p2365) target = $region83
        $region82: #{tpu_custom_call.1} parent=78 // pred_region
          %s2368 = sand.u32 %s148, 1
          %s2369 = scalar_lea.sflag [#allocation4], %s2368
          %s2370 = sand.u32 %s148, 1
          %s2371 = smul.addr %s2370, 56
          %s2372 = scalar_lea.vmem [#allocation11], %s2371
          %2374 = dma.done %s2369, 896
        $region83: #{tpu_custom_call.1} parent=78 // pred_fallthru
          _
        // Predicated region
        $region84: #{tpu_custom_call.1} parent=78 // pred_check
          %p2375 = pneg %p189
        $region85: #{tpu_custom_call.1} parent=78 // pred_check_branch
          %2377 = sbr.rel (%p2375) target = $region87
        $region86: #{tpu_custom_call.1} parent=78 // pred_region
          %s2378 = sand.u32 %s174, 1
          %s2379 = scalar_lea.sflag [#allocation13], %s2378
          %s2380 = sand.u32 %s174, 1
          %s2381 = smul.addr %s2380, 16
          %s2382 = scalar_lea.vmem [#allocation12], %s2381
          %2384 = dma.done %s2379, 256
        $region87: #{tpu_custom_call.1} parent=78 // pred_fallthru
          _
      $region79: #{tpu_custom_call.1} parent=5 // pred_fallthru
        _
    $region6: #{tpu_custom_call.1} parent=1 // loop_footer
      %s28 = sadd.s32 1, %s24
    $region7: #{tpu_custom_call.1} parent=1 // loop_footer_branch
      %23 = sbr.rel target = $region3
    $region8: #{tpu_custom_call.1} parent=1 // loop_exit
      _
    %2385 = vsyncpa [#allocation3], 1
    %s2386 = scalar_lea.sflag [#allocation3], 1
    %2387 = vsyncpa %s2386, 1
    %2388 = vsyncpa [#allocation6], 1
    %2389 = vsyncpa [#allocation9], 1
    %2390 = vsyncpa [#allocation4], 1
    %s2391 = scalar_lea.sflag [#allocation4], 1
    %2392 = vsyncpa %s2391, 1
    %2393 = vsyncpa [#allocation13], 1
    %s2394 = scalar_lea.sflag [#allocation13], 1
    %2395 = vsyncpa %s2394, 1

</llo_original>
